<compile_context>
chip_gen: v6e
topology: v6e:2x2x1
jax: 0.10.0
libtpu: 0.0.40
codegen_flags: <defaults>
</compile_context>

<pallas_src>
import functools

import numpy as np
import jax
import jax.numpy as jnp
from jax.experimental import pallas as pl
from jax.experimental.pallas import tpu as pltpu

_MIB = 1024 * 1024


# ---------------------------------------------------------------------------
# Fused path: channel pooling + conv + sigmoid, one sample per grid step.
# ---------------------------------------------------------------------------
def _fused_kernel(x_ref, w_ref, o_ref, pad_ref, *, ksize, pad, inv_c):
    # x_ref: (1, C, H, W)   w_ref: SMEM (2*k*k,) f32   o_ref: (1, 1, H, W)
    # pad_ref: VMEM (2, H+2p, W+2p) f32 scratch (border stays zero).
    h = o_ref.shape[2]
    w = o_ref.shape[3]

    x = x_ref[0]                                           # (C, H, W), native dtype
    avg = jnp.sum(x, axis=0, dtype=jnp.float32) * inv_c    # f32 accumulation
    mx = jnp.max(x, axis=0).astype(jnp.float32)            # native-dtype max

    # Zero the padded scratch only on the first grid step; later steps only
    # rewrite the interior, so the zero border is preserved.
    @pl.when(pl.program_id(0) == 0)
    def _():
        pad_ref[...] = jnp.zeros_like(pad_ref)

    pad_ref[0, pad:pad + h, pad:pad + w] = avg
    pad_ref[1, pad:pad + h, pad:pad + w] = mx

    # Shift-and-accumulate convolution: 2 * k * k taps of (scalar * window).
    acc = jnp.zeros((h, w), jnp.float32)
    for ci in range(2):
        for ky in range(ksize):
            for kx in range(ksize):
                wt = w_ref[ci * ksize * ksize + ky * ksize + kx]   # SMEM scalar
                acc = acc + wt * pad_ref[ci, ky:ky + h, kx:kx + w]

    o_ref[0, 0] = jax.nn.sigmoid(acc).astype(o_ref.dtype)


def _fused_spatial_attention(x, w_flat, *, ksize, pad):
    n, c, h, w = x.shape
    itemsize = jnp.dtype(x.dtype).itemsize
    pad_bytes = 2 * (h + 2 * pad) * (w + 2 * pad) * 4
    vmem_need = (2 * (c * h * w * itemsize + h * w * itemsize)
                 + pad_bytes + 2 * _MIB)
    cost = pl.CostEstimate(
        flops=int(n * (2 * c * h * w + 2 * 2 * ksize * ksize * h * w)),
        transcendentals=int(n * h * w),
        bytes_accessed=int(n * c * h * w * itemsize + n * h * w * itemsize
                           + w_flat.size * 4),
    )
    kern = functools.partial(_fused_kernel, ksize=ksize, pad=pad, inv_c=1.0 / c)
    return pl.pallas_call(
        kern,
        out_shape=jax.ShapeDtypeStruct((n, 1, h, w), x.dtype),
        grid_spec=pltpu.PrefetchScalarGridSpec(
            num_scalar_prefetch=0,
            grid=(n,),
            in_specs=[
                pl.BlockSpec((1, c, h, w), lambda i: (i, 0, 0, 0)),
                pl.BlockSpec(memory_space=pltpu.MemorySpace.SMEM),   # weights
            ],
            out_specs=pl.BlockSpec((1, 1, h, w), lambda i: (i, 0, 0, 0)),
            scratch_shapes=[
                pltpu.VMEM((2, h + 2 * pad, w + 2 * pad), jnp.float32),
            ],
        ),
        compiler_params=pltpu.CompilerParams(
            dimension_semantics=("parallel",),
            vmem_limit_bytes=int(min(max(vmem_need, 16 * _MIB), 64 * _MIB)),
        ),
        cost_estimate=cost,
    )(x, w_flat)


# ---------------------------------------------------------------------------
# Two-phase path, Phase 1: channel mean & max pooling, lane-dense over H*W.
# ---------------------------------------------------------------------------
def _channel_pool_kernel(x_ref, o_ref, *, inv_c):
    x = x_ref[0]                                           # (C, T_HW), native dtype
    o_ref[0, 0:1, :] = (jnp.sum(x, axis=0, keepdims=True, dtype=jnp.float32)
                        * inv_c)
    o_ref[0, 1:2, :] = jnp.max(x, axis=0, keepdims=True).astype(jnp.float32)


def _choose_t_hw(c, hw_p, itemsize, n):
    """VMEM-aware, lane-dense HW tile choice.

    (a) double-buffered in+out footprint <= 12 MiB (safe on v5e's 16 MiB
        default scoped VMEM and well under v7x's 64 MiB physical VMEM),
    (b) prefer the largest tile whose input block is <= ~2 MiB (HBM roofline),
    (c) keep >= 2 total parallel grid steps when possible (v7x megacore).
    """
    budget = 12 * _MIB
    target_hi = 2 * _MIB
    cands = [t for t in range(128, hw_p + 1, 128) if hw_p % t == 0]

    def footprint(t):
        return 2 * (c * t * itemsize + 2 * t * 4)          # 2x double-buffered

    feasible = [t for t in cands if footprint(t) <= budget] or [cands[0]]
    good = [t for t in feasible if c * t * itemsize <= target_hi]
    t_hw = max(good) if good else min(feasible)
    if n * (hw_p // t_hw) < 2:                              # keep both TCs busy
        smaller = [t for t in feasible if hw_p // t >= 2]
        if smaller:
            t_hw = max(smaller)
    return t_hw


def _channel_pool(x_flat, t_hw):
    n, c, hw_p = x_flat.shape
    itemsize = jnp.dtype(x_flat.dtype).itemsize
    vmem_need = 2 * (c * t_hw * itemsize + 2 * t_hw * 4) + 2 * _MIB
    cost = pl.CostEstimate(
        flops=int(2 * n * c * hw_p),
        transcendentals=0,
        bytes_accessed=int(n * c * hw_p * itemsize + n * 2 * hw_p * 4),
    )
    kern = functools.partial(_channel_pool_kernel, inv_c=1.0 / c)
    return pl.pallas_call(
        kern,
        out_shape=jax.ShapeDtypeStruct((n, 2, hw_p), jnp.float32),
        grid_spec=pltpu.PrefetchScalarGridSpec(
            num_scalar_prefetch=0,
            grid=(n, hw_p // t_hw),
            in_specs=[pl.BlockSpec((1, c, t_hw), lambda i, j: (i, 0, j))],
            out_specs=pl.BlockSpec((1, 2, t_hw), lambda i, j: (i, 0, j)),
        ),
        compiler_params=pltpu.CompilerParams(
            dimension_semantics=("parallel", "parallel"),
            vmem_limit_bytes=int(min(max(vmem_need, 16 * _MIB), 64 * _MIB)),
        ),
        cost_estimate=cost,
    )(x_flat)


# ---------------------------------------------------------------------------
# Two-phase path, Phase 2: k x k conv (2->1 ch, zero pad, no bias) + sigmoid,
# TB samples batched per grid step.
# ---------------------------------------------------------------------------
def _conv_sigmoid_kernel(p_ref, w_ref, o_ref, pad_ref, *, ksize, pad):
    tb = p_ref.shape[0]
    h = o_ref.shape[2]
    w = o_ref.shape[3]

    # Zero the padded scratch only once; only the interior is rewritten later.
    @pl.when(pl.program_id(0) == 0)
    def _():
        pad_ref[...] = jnp.zeros_like(pad_ref)

    pad_ref[:, :, pad:pad + h, pad:pad + w] = p_ref[...].astype(jnp.float32)

    acc = jnp.zeros((tb, h, w), jnp.float32)
    for ci in range(2):
        for ky in range(ksize):
            for kx in range(ksize):
                wt = w_ref[ci * ksize * ksize + ky * ksize + kx]   # SMEM scalar
                acc = acc + wt * pad_ref[:, ci, ky:ky + h, kx:kx + w]

    o_ref[:, 0] = jax.nn.sigmoid(acc).astype(o_ref.dtype)


def _conv_sigmoid(pooled, w_flat, out_dtype, *, ksize, pad):
    n, _, h, w = pooled.shape
    tb = 1                                   # largest divisor of n, capped at 8
    for d in range(1, min(n, 8) + 1):
        if n % d == 0:
            tb = d
    cost = pl.CostEstimate(
        flops=int(n * 2 * 2 * ksize * ksize * h * w),
        transcendentals=int(n * h * w),
        bytes_accessed=int(n * 2 * h * w * 4
                           + n * h * w * jnp.dtype(out_dtype).itemsize
                           + w_flat.size * 4),
    )
    kern = functools.partial(_conv_sigmoid_kernel, ksize=ksize, pad=pad)
    return pl.pallas_call(
        kern,
        out_shape=jax.ShapeDtypeStruct((n, 1, h, w), out_dtype),
        grid_spec=pltpu.PrefetchScalarGridSpec(
            num_scalar_prefetch=0,
            grid=(n // tb,),
            in_specs=[
                pl.BlockSpec((tb, 2, h, w), lambda i: (i, 0, 0, 0)),
                pl.BlockSpec(memory_space=pltpu.MemorySpace.SMEM),   # weights
            ],
            out_specs=pl.BlockSpec((tb, 1, h, w), lambda i: (i, 0, 0, 0)),
            scratch_shapes=[
                pltpu.VMEM((tb, 2, h + 2 * pad, w + 2 * pad), jnp.float32),
            ],
        ),
        compiler_params=pltpu.CompilerParams(
            dimension_semantics=("parallel",)),
        cost_estimate=cost,
    )(pooled, w_flat)


# ---------------------------------------------------------------------------
# Public wrapper.
# ---------------------------------------------------------------------------
def spatial_attention(x, conv_w, *, kernel_size=7, force_two_phase=False):
    """SpatialAttention forward.

    x:      (N, C, H, W)
    conv_w: (1, 2, k, k)  -- PyTorch Conv2d weight layout, no bias.
    returns (N, 1, H, W), same dtype as x.
    """
    assert kernel_size in (3, 7), "kernel size must be 3 or 7"
    pad = 3 if kernel_size == 7 else 1
    n, c, h, w = x.shape
    hw = h * w
    itemsize = jnp.dtype(x.dtype).itemsize
    w_flat = conv_w.reshape(-1).astype(jnp.float32)

    # Fused path when the per-sample block comfortably fits every generation's
    # VMEM budget.
    pad_bytes = 2 * (h + 2 * pad) * (w + 2 * pad) * 4
    fused_bytes = 2 * (c * h * w * itemsize + h * w * itemsize) + pad_bytes
    if not force_two_phase and fused_bytes <= 4 * _MIB:
        return _fused_spatial_attention(x, w_flat, ksize=kernel_size, pad=pad)

    # Two-phase path: lane-dense pooling over a 128-padded H*W axis, then the
    # tiny conv+sigmoid on the pooled maps (padded tail discarded).
    hw_p = ((hw + 127) // 128) * 128
    x_flat = x.reshape(n, c, hw)
    if hw_p != hw:
        x_flat = jnp.pad(x_flat, ((0, 0), (0, 0), (0, hw_p - hw)))
    t_hw = _choose_t_hw(c, hw_p, itemsize, n)
    pooled = _channel_pool(x_flat, t_hw)                    # (N, 2, hw_p) f32
    pooled = pooled[:, :, :hw].reshape(n, 2, h, w)
    return _conv_sigmoid(pooled, w_flat, x.dtype, ksize=kernel_size, pad=pad)


def spatial_attention_reference(x, conv_w, *, kernel_size=7):
    """Pure-JAX reference mirroring the PyTorch forward."""
    pad = 3 if kernel_size == 7 else 1
    avg = jnp.mean(x, axis=1, keepdims=True)
    mx = jnp.max(x, axis=1, keepdims=True)
    y = jnp.concatenate([avg, mx], axis=1)                  # (N, 2, H, W)
    y = jax.lax.conv_general_dilated(
        y, conv_w, window_strides=(1, 1),
        padding=((pad, pad), (pad, pad)),
        dimension_numbers=("NCHW", "OIHW", "NCHW"))
    return jax.nn.sigmoid(y)


if __name__ == "__main__":
    N, C, H, W = 2, 4, 16, 16
    KSIZE = 7
    key = jax.random.PRNGKey(0)
    k_x, k_w = jax.random.split(key)
    x = jax.random.normal(k_x, (N, C, H, W), jnp.float32)
    conv_w = 0.1 * jax.random.normal(k_w, (1, 2, KSIZE, KSIZE), jnp.float32)

    ref = spatial_attention_reference(x, conv_w, kernel_size=KSIZE)

    # Fused path (default for small maps).
    out_fused = jax.block_until_ready(
        spatial_attention(x, conv_w, kernel_size=KSIZE))
    np.testing.assert_allclose(np.asarray(out_fused), np.asarray(ref),
                               rtol=1e-4, atol=1e-5)

    # Two-phase path (exercised explicitly so both code paths stay healthy).
    out_two = jax.block_until_ready(
        spatial_attention(x, conv_w, kernel_size=KSIZE, force_two_phase=True))
    np.testing.assert_allclose(np.asarray(out_two), np.asarray(ref),
                               rtol=1e-4, atol=1e-5)

    print("KERNEL_OK")
</pallas_src>

<mosaic_0001>
module attributes {stable_mosaic.version = 11 : i64} {
  func.func @_fused_kernel(%arg0: i32, %arg1: memref<1x4x16x16xf32, #tpu.memory_space<vmem>>, %arg2: memref<98xf32, #tpu.memory_space<smem>>, %arg3: memref<1x1x16x16xf32, #tpu.memory_space<vmem>>, %arg4: memref<2x22x22xf32, #tpu.memory_space<vmem>>) attributes {dimension_semantics = [#tpu.dimension_semantics<parallel>], iteration_bounds = array<i64: 2>, scalar_prefetch = 0 : i64, scratch_operands = 1 : i64, tpu.core_type = #tpu.core_type<tc>, window_params = [{transform_indices = @transform_0, window_bounds = array<i64: 1, 4, 16, 16>}, {transform_indices = @transform_1, window_bounds = array<i64: 98>}, {transform_indices = @transform_2, window_bounds = array<i64: 1, 1, 16, 16>}]} {
    %c0 = arith.constant 0 : index
    %c0_0 = arith.constant 0 : index
    %c0_1 = arith.constant 0 : index
    %c0_2 = arith.constant 0 : index
    %0 = vector.load %arg1[%c0, %c0_0, %c0_1, %c0_2] : memref<1x4x16x16xf32, #tpu.memory_space<vmem>>, vector<1x4x16x16xf32>
    %1 = vector.shape_cast %0 : vector<1x4x16x16xf32> to vector<4x16x16xf32>
    %cst = arith.constant dense<0.000000e+00> : vector<16x16xf32>
    %2 = vector.multi_reduction <add>, %1, %cst [0] : vector<4x16x16xf32> to vector<16x16xf32>
    %cst_3 = arith.constant 2.500000e-01 : f32
    %3 = vector.broadcast %cst_3 : f32 to vector<16x16xf32>
    %4 = arith.mulf %2, %3 : vector<16x16xf32>
    %cst_4 = arith.constant dense<0xFF800000> : vector<16x16xf32>
    %5 = vector.multi_reduction <maximumf>, %1, %cst_4 [0] : vector<4x16x16xf32> to vector<16x16xf32>
    %c0_i32 = arith.constant 0 : i32
    %6 = arith.cmpi eq, %arg0, %c0_i32 : i32
    %7 = arith.extui %6 : i1 to i32
    %c0_i32_5 = arith.constant 0 : i32
    %8 = arith.cmpi ne, %7, %c0_i32_5 : i32
    scf.if %8 {
      %cst_313 = arith.constant 0.000000e+00 : f32
      %612 = vector.broadcast %cst_313 : f32 to vector<2x22x22xf32>
      %c0_314 = arith.constant 0 : index
      %c0_315 = arith.constant 0 : index
      %c0_316 = arith.constant 0 : index
      %613 = vector.load %arg4[%c0_314, %c0_315, %c0_316] : memref<2x22x22xf32, #tpu.memory_space<vmem>>, vector<2x22x22xf32>
      tpu.vector_store %arg4[%c0_314, %c0_315, %c0_316], %612 {strides = array<i32>} : memref<2x22x22xf32, #tpu.memory_space<vmem>>, vector<2x22x22xf32>,
    } else {
    }
    %c0_6 = arith.constant 0 : index
    %c3 = arith.constant 3 : index
    %c3_7 = arith.constant 3 : index
    %9 = vector.load %arg4[%c0_6, %c3, %c3_7] : memref<2x22x22xf32, #tpu.memory_space<vmem>>, vector<1x16x16xf32>
    %10 = vector.shape_cast %9 : vector<1x16x16xf32> to vector<16x16xf32>
    %11 = vector.shape_cast %4 : vector<16x16xf32> to vector<1x16x16xf32>
    tpu.vector_store %arg4[%c0_6, %c3, %c3_7], %11 {strides = array<i32>} : memref<2x22x22xf32, #tpu.memory_space<vmem>>, vector<1x16x16xf32>,
    %c1 = arith.constant 1 : index
    %c3_8 = arith.constant 3 : index
    %c3_9 = arith.constant 3 : index
    %12 = vector.load %arg4[%c1, %c3_8, %c3_9] : memref<2x22x22xf32, #tpu.memory_space<vmem>>, vector<1x16x16xf32>
    %13 = vector.shape_cast %12 : vector<1x16x16xf32> to vector<16x16xf32>
    %14 = vector.shape_cast %5 : vector<16x16xf32> to vector<1x16x16xf32>
    tpu.vector_store %arg4[%c1, %c3_8, %c3_9], %14 {strides = array<i32>} : memref<2x22x22xf32, #tpu.memory_space<vmem>>, vector<1x16x16xf32>,
    %cst_10 = arith.constant 0.000000e+00 : f32
    %15 = vector.broadcast %cst_10 : f32 to vector<16x16xf32>
    %c0_11 = arith.constant 0 : index
    %16 = memref.load %arg2[%c0_11] : memref<98xf32, #tpu.memory_space<smem>>
    %c0_12 = arith.constant 0 : index
    %c0_13 = arith.constant 0 : index
    %c0_14 = arith.constant 0 : index
    %17 = vector.load %arg4[%c0_12, %c0_13, %c0_14] : memref<2x22x22xf32, #tpu.memory_space<vmem>>, vector<1x16x16xf32>
    %18 = vector.shape_cast %17 : vector<1x16x16xf32> to vector<16x16xf32>
    %19 = vector.broadcast %16 : f32 to vector<16x16xf32>
    %20 = arith.mulf %19, %18 : vector<16x16xf32>
    %21 = arith.addf %15, %20 : vector<16x16xf32>
    %c1_15 = arith.constant 1 : index
    %22 = memref.load %arg2[%c1_15] : memref<98xf32, #tpu.memory_space<smem>>
    %c0_16 = arith.constant 0 : index
    %c0_17 = arith.constant 0 : index
    %c1_18 = arith.constant 1 : index
    %23 = vector.load %arg4[%c0_16, %c0_17, %c1_18] : memref<2x22x22xf32, #tpu.memory_space<vmem>>, vector<1x16x16xf32>
    %24 = vector.shape_cast %23 : vector<1x16x16xf32> to vector<16x16xf32>
    %25 = vector.broadcast %22 : f32 to vector<16x16xf32>
    %26 = arith.mulf %25, %24 : vector<16x16xf32>
    %27 = arith.addf %21, %26 : vector<16x16xf32>
    %c2 = arith.constant 2 : index
    %28 = memref.load %arg2[%c2] : memref<98xf32, #tpu.memory_space<smem>>
    %c0_19 = arith.constant 0 : index
    %c0_20 = arith.constant 0 : index
    %c2_21 = arith.constant 2 : index
    %29 = vector.load %arg4[%c0_19, %c0_20, %c2_21] : memref<2x22x22xf32, #tpu.memory_space<vmem>>, vector<1x16x16xf32>
    %30 = vector.shape_cast %29 : vector<1x16x16xf32> to vector<16x16xf32>
    %31 = vector.broadcast %28 : f32 to vector<16x16xf32>
    %32 = arith.mulf %31, %30 : vector<16x16xf32>
    %33 = arith.addf %27, %32 : vector<16x16xf32>
    %c3_22 = arith.constant 3 : index
    %34 = memref.load %arg2[%c3_22] : memref<98xf32, #tpu.memory_space<smem>>
    %c0_23 = arith.constant 0 : index
    %c0_24 = arith.constant 0 : index
    %c3_25 = arith.constant 3 : index
    %35 = vector.load %arg4[%c0_23, %c0_24, %c3_25] : memref<2x22x22xf32, #tpu.memory_space<vmem>>, vector<1x16x16xf32>
    %36 = vector.shape_cast %35 : vector<1x16x16xf32> to vector<16x16xf32>
    %37 = vector.broadcast %34 : f32 to vector<16x16xf32>
    %38 = arith.mulf %37, %36 : vector<16x16xf32>
    %39 = arith.addf %33, %38 : vector<16x16xf32>
    %c4 = arith.constant 4 : index
    %40 = memref.load %arg2[%c4] : memref<98xf32, #tpu.memory_space<smem>>
    %c0_26 = arith.constant 0 : index
    %c0_27 = arith.constant 0 : index
    %c4_28 = arith.constant 4 : index
    %41 = vector.load %arg4[%c0_26, %c0_27, %c4_28] : memref<2x22x22xf32, #tpu.memory_space<vmem>>, vector<1x16x16xf32>
    %42 = vector.shape_cast %41 : vector<1x16x16xf32> to vector<16x16xf32>
    %43 = vector.broadcast %40 : f32 to vector<16x16xf32>
    %44 = arith.mulf %43, %42 : vector<16x16xf32>
    %45 = arith.addf %39, %44 : vector<16x16xf32>
    %c5 = arith.constant 5 : index
    %46 = memref.load %arg2[%c5] : memref<98xf32, #tpu.memory_space<smem>>
    %c0_29 = arith.constant 0 : index
    %c0_30 = arith.constant 0 : index
    %c5_31 = arith.constant 5 : index
    %47 = vector.load %arg4[%c0_29, %c0_30, %c5_31] : memref<2x22x22xf32, #tpu.memory_space<vmem>>, vector<1x16x16xf32>
    %48 = vector.shape_cast %47 : vector<1x16x16xf32> to vector<16x16xf32>
    %49 = vector.broadcast %46 : f32 to vector<16x16xf32>
    %50 = arith.mulf %49, %48 : vector<16x16xf32>
    %51 = arith.addf %45, %50 : vector<16x16xf32>
    %c6 = arith.constant 6 : index
    %52 = memref.load %arg2[%c6] : memref<98xf32, #tpu.memory_space<smem>>
    %c0_32 = arith.constant 0 : index
    %c0_33 = arith.constant 0 : index
    %c6_34 = arith.constant 6 : index
    %53 = vector.load %arg4[%c0_32, %c0_33, %c6_34] : memref<2x22x22xf32, #tpu.memory_space<vmem>>, vector<1x16x16xf32>
    %54 = vector.shape_cast %53 : vector<1x16x16xf32> to vector<16x16xf32>
    %55 = vector.broadcast %52 : f32 to vector<16x16xf32>
    %56 = arith.mulf %55, %54 : vector<16x16xf32>
    %57 = arith.addf %51, %56 : vector<16x16xf32>
    %c7 = arith.constant 7 : index
    %58 = memref.load %arg2[%c7] : memref<98xf32, #tpu.memory_space<smem>>
    %c0_35 = arith.constant 0 : index
    %c1_36 = arith.constant 1 : index
    %c0_37 = arith.constant 0 : index
    %59 = vector.load %arg4[%c0_35, %c1_36, %c0_37] : memref<2x22x22xf32, #tpu.memory_space<vmem>>, vector<1x16x16xf32>
    %60 = vector.shape_cast %59 : vector<1x16x16xf32> to vector<16x16xf32>
    %61 = vector.broadcast %58 : f32 to vector<16x16xf32>
    %62 = arith.mulf %61, %60 : vector<16x16xf32>
    %63 = arith.addf %57, %62 : vector<16x16xf32>
    %c8 = arith.constant 8 : index
    %64 = memref.load %arg2[%c8] : memref<98xf32, #tpu.memory_space<smem>>
    %c0_38 = arith.constant 0 : index
    %c1_39 = arith.constant 1 : index
    %c1_40 = arith.constant 1 : index
    %65 = vector.load %arg4[%c0_38, %c1_39, %c1_40] : memref<2x22x22xf32, #tpu.memory_space<vmem>>, vector<1x16x16xf32>
    %66 = vector.shape_cast %65 : vector<1x16x16xf32> to vector<16x16xf32>
    %67 = vector.broadcast %64 : f32 to vector<16x16xf32>
    %68 = arith.mulf %67, %66 : vector<16x16xf32>
    %69 = arith.addf %63, %68 : vector<16x16xf32>
    %c9 = arith.constant 9 : index
    %70 = memref.load %arg2[%c9] : memref<98xf32, #tpu.memory_space<smem>>
    %c0_41 = arith.constant 0 : index
    %c1_42 = arith.constant 1 : index
    %c2_43 = arith.constant 2 : index
    %71 = vector.load %arg4[%c0_41, %c1_42, %c2_43] : memref<2x22x22xf32, #tpu.memory_space<vmem>>, vector<1x16x16xf32>
    %72 = vector.shape_cast %71 : vector<1x16x16xf32> to vector<16x16xf32>
    %73 = vector.broadcast %70 : f32 to vector<16x16xf32>
    %74 = arith.mulf %73, %72 : vector<16x16xf32>
    %75 = arith.addf %69, %74 : vector<16x16xf32>
    %c10 = arith.constant 10 : index
    %76 = memref.load %arg2[%c10] : memref<98xf32, #tpu.memory_space<smem>>
    %c0_44 = arith.constant 0 : index
    %c1_45 = arith.constant 1 : index
    %c3_46 = arith.constant 3 : index
    %77 = vector.load %arg4[%c0_44, %c1_45, %c3_46] : memref<2x22x22xf32, #tpu.memory_space<vmem>>, vector<1x16x16xf32>
    %78 = vector.shape_cast %77 : vector<1x16x16xf32> to vector<16x16xf32>
    %79 = vector.broadcast %76 : f32 to vector<16x16xf32>
    %80 = arith.mulf %79, %78 : vector<16x16xf32>
    %81 = arith.addf %75, %80 : vector<16x16xf32>
    %c11 = arith.constant 11 : index
    %82 = memref.load %arg2[%c11] : memref<98xf32, #tpu.memory_space<smem>>
    %c0_47 = arith.constant 0 : index
    %c1_48 = arith.constant 1 : index
    %c4_49 = arith.constant 4 : index
    %83 = vector.load %arg4[%c0_47, %c1_48, %c4_49] : memref<2x22x22xf32, #tpu.memory_space<vmem>>, vector<1x16x16xf32>
    %84 = vector.shape_cast %83 : vector<1x16x16xf32> to vector<16x16xf32>
    %85 = vector.broadcast %82 : f32 to vector<16x16xf32>
    %86 = arith.mulf %85, %84 : vector<16x16xf32>
    %87 = arith.addf %81, %86 : vector<16x16xf32>
    %c12 = arith.constant 12 : index
    %88 = memref.load %arg2[%c12] : memref<98xf32, #tpu.memory_space<smem>>
    %c0_50 = arith.constant 0 : index
    %c1_51 = arith.constant 1 : index
    %c5_52 = arith.constant 5 : index
    %89 = vector.load %arg4[%c0_50, %c1_51, %c5_52] : memref<2x22x22xf32, #tpu.memory_space<vmem>>, vector<1x16x16xf32>
    %90 = vector.shape_cast %89 : vector<1x16x16xf32> to vector<16x16xf32>
    %91 = vector.broadcast %88 : f32 to vector<16x16xf32>
    %92 = arith.mulf %91, %90 : vector<16x16xf32>
    %93 = arith.addf %87, %92 : vector<16x16xf32>
    %c13 = arith.constant 13 : index
    %94 = memref.load %arg2[%c13] : memref<98xf32, #tpu.memory_space<smem>>
    %c0_53 = arith.constant 0 : index
    %c1_54 = arith.constant 1 : index
    %c6_55 = arith.constant 6 : index
    %95 = vector.load %arg4[%c0_53, %c1_54, %c6_55] : memref<2x22x22xf32, #tpu.memory_space<vmem>>, vector<1x16x16xf32>
    %96 = vector.shape_cast %95 : vector<1x16x16xf32> to vector<16x16xf32>
    %97 = vector.broadcast %94 : f32 to vector<16x16xf32>
    %98 = arith.mulf %97, %96 : vector<16x16xf32>
    %99 = arith.addf %93, %98 : vector<16x16xf32>
    %c14 = arith.constant 14 : index
    %100 = memref.load %arg2[%c14] : memref<98xf32, #tpu.memory_space<smem>>
    %c0_56 = arith.constant 0 : index
    %c2_57 = arith.constant 2 : index
    %c0_58 = arith.constant 0 : index
    %101 = vector.load %arg4[%c0_56, %c2_57, %c0_58] : memref<2x22x22xf32, #tpu.memory_space<vmem>>, vector<1x16x16xf32>
    %102 = vector.shape_cast %101 : vector<1x16x16xf32> to vector<16x16xf32>
    %103 = vector.broadcast %100 : f32 to vector<16x16xf32>
    %104 = arith.mulf %103, %102 : vector<16x16xf32>
    %105 = arith.addf %99, %104 : vector<16x16xf32>
    %c15 = arith.constant 15 : index
    %106 = memref.load %arg2[%c15] : memref<98xf32, #tpu.memory_space<smem>>
    %c0_59 = arith.constant 0 : index
    %c2_60 = arith.constant 2 : index
    %c1_61 = arith.constant 1 : index
    %107 = vector.load %arg4[%c0_59, %c2_60, %c1_61] : memref<2x22x22xf32, #tpu.memory_space<vmem>>, vector<1x16x16xf32>
    %108 = vector.shape_cast %107 : vector<1x16x16xf32> to vector<16x16xf32>
    %109 = vector.broadcast %106 : f32 to vector<16x16xf32>
    %110 = arith.mulf %109, %108 : vector<16x16xf32>
    %111 = arith.addf %105, %110 : vector<16x16xf32>
    %c16 = arith.constant 16 : index
    %112 = memref.load %arg2[%c16] : memref<98xf32, #tpu.memory_space<smem>>
    %c0_62 = arith.constant 0 : index
    %c2_63 = arith.constant 2 : index
    %c2_64 = arith.constant 2 : index
    %113 = vector.load %arg4[%c0_62, %c2_63, %c2_64] : memref<2x22x22xf32, #tpu.memory_space<vmem>>, vector<1x16x16xf32>
    %114 = vector.shape_cast %113 : vector<1x16x16xf32> to vector<16x16xf32>
    %115 = vector.broadcast %112 : f32 to vector<16x16xf32>
    %116 = arith.mulf %115, %114 : vector<16x16xf32>
    %117 = arith.addf %111, %116 : vector<16x16xf32>
    %c17 = arith.constant 17 : index
    %118 = memref.load %arg2[%c17] : memref<98xf32, #tpu.memory_space<smem>>
    %c0_65 = arith.constant 0 : index
    %c2_66 = arith.constant 2 : index
    %c3_67 = arith.constant 3 : index
    %119 = vector.load %arg4[%c0_65, %c2_66, %c3_67] : memref<2x22x22xf32, #tpu.memory_space<vmem>>, vector<1x16x16xf32>
    %120 = vector.shape_cast %119 : vector<1x16x16xf32> to vector<16x16xf32>
    %121 = vector.broadcast %118 : f32 to vector<16x16xf32>
    %122 = arith.mulf %121, %120 : vector<16x16xf32>
    %123 = arith.addf %117, %122 : vector<16x16xf32>
    %c18 = arith.constant 18 : index
    %124 = memref.load %arg2[%c18] : memref<98xf32, #tpu.memory_space<smem>>
    %c0_68 = arith.constant 0 : index
    %c2_69 = arith.constant 2 : index
    %c4_70 = arith.constant 4 : index
    %125 = vector.load %arg4[%c0_68, %c2_69, %c4_70] : memref<2x22x22xf32, #tpu.memory_space<vmem>>, vector<1x16x16xf32>
    %126 = vector.shape_cast %125 : vector<1x16x16xf32> to vector<16x16xf32>
    %127 = vector.broadcast %124 : f32 to vector<16x16xf32>
    %128 = arith.mulf %127, %126 : vector<16x16xf32>
    %129 = arith.addf %123, %128 : vector<16x16xf32>
    %c19 = arith.constant 19 : index
    %130 = memref.load %arg2[%c19] : memref<98xf32, #tpu.memory_space<smem>>
    %c0_71 = arith.constant 0 : index
    %c2_72 = arith.constant 2 : index
    %c5_73 = arith.constant 5 : index
    %131 = vector.load %arg4[%c0_71, %c2_72, %c5_73] : memref<2x22x22xf32, #tpu.memory_space<vmem>>, vector<1x16x16xf32>
    %132 = vector.shape_cast %131 : vector<1x16x16xf32> to vector<16x16xf32>
    %133 = vector.broadcast %130 : f32 to vector<16x16xf32>
    %134 = arith.mulf %133, %132 : vector<16x16xf32>
    %135 = arith.addf %129, %134 : vector<16x16xf32>
    %c20 = arith.constant 20 : index
    %136 = memref.load %arg2[%c20] : memref<98xf32, #tpu.memory_space<smem>>
    %c0_74 = arith.constant 0 : index
    %c2_75 = arith.constant 2 : index
    %c6_76 = arith.constant 6 : index
    %137 = vector.load %arg4[%c0_74, %c2_75, %c6_76] : memref<2x22x22xf32, #tpu.memory_space<vmem>>, vector<1x16x16xf32>
    %138 = vector.shape_cast %137 : vector<1x16x16xf32> to vector<16x16xf32>
    %139 = vector.broadcast %136 : f32 to vector<16x16xf32>
    %140 = arith.mulf %139, %138 : vector<16x16xf32>
    %141 = arith.addf %135, %140 : vector<16x16xf32>
    %c21 = arith.constant 21 : index
    %142 = memref.load %arg2[%c21] : memref<98xf32, #tpu.memory_space<smem>>
    %c0_77 = arith.constant 0 : index
    %c3_78 = arith.constant 3 : index
    %c0_79 = arith.constant 0 : index
    %143 = vector.load %arg4[%c0_77, %c3_78, %c0_79] : memref<2x22x22xf32, #tpu.memory_space<vmem>>, vector<1x16x16xf32>
    %144 = vector.shape_cast %143 : vector<1x16x16xf32> to vector<16x16xf32>
    %145 = vector.broadcast %142 : f32 to vector<16x16xf32>
    %146 = arith.mulf %145, %144 : vector<16x16xf32>
    %147 = arith.addf %141, %146 : vector<16x16xf32>
    %c22 = arith.constant 22 : index
    %148 = memref.load %arg2[%c22] : memref<98xf32, #tpu.memory_space<smem>>
    %c0_80 = arith.constant 0 : index
    %c3_81 = arith.constant 3 : index
    %c1_82 = arith.constant 1 : index
    %149 = vector.load %arg4[%c0_80, %c3_81, %c1_82] : memref<2x22x22xf32, #tpu.memory_space<vmem>>, vector<1x16x16xf32>
    %150 = vector.shape_cast %149 : vector<1x16x16xf32> to vector<16x16xf32>
    %151 = vector.broadcast %148 : f32 to vector<16x16xf32>
    %152 = arith.mulf %151, %150 : vector<16x16xf32>
    %153 = arith.addf %147, %152 : vector<16x16xf32>
    %c23 = arith.constant 23 : index
    %154 = memref.load %arg2[%c23] : memref<98xf32, #tpu.memory_space<smem>>
    %c0_83 = arith.constant 0 : index
    %c3_84 = arith.constant 3 : index
    %c2_85 = arith.constant 2 : index
    %155 = vector.load %arg4[%c0_83, %c3_84, %c2_85] : memref<2x22x22xf32, #tpu.memory_space<vmem>>, vector<1x16x16xf32>
    %156 = vector.shape_cast %155 : vector<1x16x16xf32> to vector<16x16xf32>
    %157 = vector.broadcast %154 : f32 to vector<16x16xf32>
    %158 = arith.mulf %157, %156 : vector<16x16xf32>
    %159 = arith.addf %153, %158 : vector<16x16xf32>
    %c24 = arith.constant 24 : index
    %160 = memref.load %arg2[%c24] : memref<98xf32, #tpu.memory_space<smem>>
    %c0_86 = arith.constant 0 : index
    %c3_87 = arith.constant 3 : index
    %c3_88 = arith.constant 3 : index
    %161 = vector.load %arg4[%c0_86, %c3_87, %c3_88] : memref<2x22x22xf32, #tpu.memory_space<vmem>>, vector<1x16x16xf32>
    %162 = vector.shape_cast %161 : vector<1x16x16xf32> to vector<16x16xf32>
    %163 = vector.broadcast %160 : f32 to vector<16x16xf32>
    %164 = arith.mulf %163, %162 : vector<16x16xf32>
    %165 = arith.addf %159, %164 : vector<16x16xf32>
    %c25 = arith.constant 25 : index
    %166 = memref.load %arg2[%c25] : memref<98xf32, #tpu.memory_space<smem>>
    %c0_89 = arith.constant 0 : index
    %c3_90 = arith.constant 3 : index
    %c4_91 = arith.constant 4 : index
    %167 = vector.load %arg4[%c0_89, %c3_90, %c4_91] : memref<2x22x22xf32, #tpu.memory_space<vmem>>, vector<1x16x16xf32>
    %168 = vector.shape_cast %167 : vector<1x16x16xf32> to vector<16x16xf32>
    %169 = vector.broadcast %166 : f32 to vector<16x16xf32>
    %170 = arith.mulf %169, %168 : vector<16x16xf32>
    %171 = arith.addf %165, %170 : vector<16x16xf32>
    %c26 = arith.constant 26 : index
    %172 = memref.load %arg2[%c26] : memref<98xf32, #tpu.memory_space<smem>>
    %c0_92 = arith.constant 0 : index
    %c3_93 = arith.constant 3 : index
    %c5_94 = arith.constant 5 : index
    %173 = vector.load %arg4[%c0_92, %c3_93, %c5_94] : memref<2x22x22xf32, #tpu.memory_space<vmem>>, vector<1x16x16xf32>
    %174 = vector.shape_cast %173 : vector<1x16x16xf32> to vector<16x16xf32>
    %175 = vector.broadcast %172 : f32 to vector<16x16xf32>
    %176 = arith.mulf %175, %174 : vector<16x16xf32>
    %177 = arith.addf %171, %176 : vector<16x16xf32>
    %c27 = arith.constant 27 : index
    %178 = memref.load %arg2[%c27] : memref<98xf32, #tpu.memory_space<smem>>
    %c0_95 = arith.constant 0 : index
    %c3_96 = arith.constant 3 : index
    %c6_97 = arith.constant 6 : index
    %179 = vector.load %arg4[%c0_95, %c3_96, %c6_97] : memref<2x22x22xf32, #tpu.memory_space<vmem>>, vector<1x16x16xf32>
    %180 = vector.shape_cast %179 : vector<1x16x16xf32> to vector<16x16xf32>
    %181 = vector.broadcast %178 : f32 to vector<16x16xf32>
    %182 = arith.mulf %181, %180 : vector<16x16xf32>
    %183 = arith.addf %177, %182 : vector<16x16xf32>
    %c28 = arith.constant 28 : index
    %184 = memref.load %arg2[%c28] : memref<98xf32, #tpu.memory_space<smem>>
    %c0_98 = arith.constant 0 : index
    %c4_99 = arith.constant 4 : index
    %c0_100 = arith.constant 0 : index
    %185 = vector.load %arg4[%c0_98, %c4_99, %c0_100] : memref<2x22x22xf32, #tpu.memory_space<vmem>>, vector<1x16x16xf32>
    %186 = vector.shape_cast %185 : vector<1x16x16xf32> to vector<16x16xf32>
    %187 = vector.broadcast %184 : f32 to vector<16x16xf32>
    %188 = arith.mulf %187, %186 : vector<16x16xf32>
    %189 = arith.addf %183, %188 : vector<16x16xf32>
    %c29 = arith.constant 29 : index
    %190 = memref.load %arg2[%c29] : memref<98xf32, #tpu.memory_space<smem>>
    %c0_101 = arith.constant 0 : index
    %c4_102 = arith.constant 4 : index
    %c1_103 = arith.constant 1 : index
    %191 = vector.load %arg4[%c0_101, %c4_102, %c1_103] : memref<2x22x22xf32, #tpu.memory_space<vmem>>, vector<1x16x16xf32>
    %192 = vector.shape_cast %191 : vector<1x16x16xf32> to vector<16x16xf32>
    %193 = vector.broadcast %190 : f32 to vector<16x16xf32>
    %194 = arith.mulf %193, %192 : vector<16x16xf32>
    %195 = arith.addf %189, %194 : vector<16x16xf32>
    %c30 = arith.constant 30 : index
    %196 = memref.load %arg2[%c30] : memref<98xf32, #tpu.memory_space<smem>>
    %c0_104 = arith.constant 0 : index
    %c4_105 = arith.constant 4 : index
    %c2_106 = arith.constant 2 : index
    %197 = vector.load %arg4[%c0_104, %c4_105, %c2_106] : memref<2x22x22xf32, #tpu.memory_space<vmem>>, vector<1x16x16xf32>
    %198 = vector.shape_cast %197 : vector<1x16x16xf32> to vector<16x16xf32>
    %199 = vector.broadcast %196 : f32 to vector<16x16xf32>
    %200 = arith.mulf %199, %198 : vector<16x16xf32>
    %201 = arith.addf %195, %200 : vector<16x16xf32>
    %c31 = arith.constant 31 : index
    %202 = memref.load %arg2[%c31] : memref<98xf32, #tpu.memory_space<smem>>
    %c0_107 = arith.constant 0 : index
    %c4_108 = arith.constant 4 : index
    %c3_109 = arith.constant 3 : index
    %203 = vector.load %arg4[%c0_107, %c4_108, %c3_109] : memref<2x22x22xf32, #tpu.memory_space<vmem>>, vector<1x16x16xf32>
    %204 = vector.shape_cast %203 : vector<1x16x16xf32> to vector<16x16xf32>
    %205 = vector.broadcast %202 : f32 to vector<16x16xf32>
    %206 = arith.mulf %205, %204 : vector<16x16xf32>
    %207 = arith.addf %201, %206 : vector<16x16xf32>
    %c32 = arith.constant 32 : index
    %208 = memref.load %arg2[%c32] : memref<98xf32, #tpu.memory_space<smem>>
    %c0_110 = arith.constant 0 : index
    %c4_111 = arith.constant 4 : index
    %c4_112 = arith.constant 4 : index
    %209 = vector.load %arg4[%c0_110, %c4_111, %c4_112] : memref<2x22x22xf32, #tpu.memory_space<vmem>>, vector<1x16x16xf32>
    %210 = vector.shape_cast %209 : vector<1x16x16xf32> to vector<16x16xf32>
    %211 = vector.broadcast %208 : f32 to vector<16x16xf32>
    %212 = arith.mulf %211, %210 : vector<16x16xf32>
    %213 = arith.addf %207, %212 : vector<16x16xf32>
    %c33 = arith.constant 33 : index
    %214 = memref.load %arg2[%c33] : memref<98xf32, #tpu.memory_space<smem>>
    %c0_113 = arith.constant 0 : index
    %c4_114 = arith.constant 4 : index
    %c5_115 = arith.constant 5 : index
    %215 = vector.load %arg4[%c0_113, %c4_114, %c5_115] : memref<2x22x22xf32, #tpu.memory_space<vmem>>, vector<1x16x16xf32>
    %216 = vector.shape_cast %215 : vector<1x16x16xf32> to vector<16x16xf32>
    %217 = vector.broadcast %214 : f32 to vector<16x16xf32>
    %218 = arith.mulf %217, %216 : vector<16x16xf32>
    %219 = arith.addf %213, %218 : vector<16x16xf32>
    %c34 = arith.constant 34 : index
    %220 = memref.load %arg2[%c34] : memref<98xf32, #tpu.memory_space<smem>>
    %c0_116 = arith.constant 0 : index
    %c4_117 = arith.constant 4 : index
    %c6_118 = arith.constant 6 : index
    %221 = vector.load %arg4[%c0_116, %c4_117, %c6_118] : memref<2x22x22xf32, #tpu.memory_space<vmem>>, vector<1x16x16xf32>
    %222 = vector.shape_cast %221 : vector<1x16x16xf32> to vector<16x16xf32>
    %223 = vector.broadcast %220 : f32 to vector<16x16xf32>
    %224 = arith.mulf %223, %222 : vector<16x16xf32>
    %225 = arith.addf %219, %224 : vector<16x16xf32>
    %c35 = arith.constant 35 : index
    %226 = memref.load %arg2[%c35] : memref<98xf32, #tpu.memory_space<smem>>
    %c0_119 = arith.constant 0 : index
    %c5_120 = arith.constant 5 : index
    %c0_121 = arith.constant 0 : index
    %227 = vector.load %arg4[%c0_119, %c5_120, %c0_121] : memref<2x22x22xf32, #tpu.memory_space<vmem>>, vector<1x16x16xf32>
    %228 = vector.shape_cast %227 : vector<1x16x16xf32> to vector<16x16xf32>
    %229 = vector.broadcast %226 : f32 to vector<16x16xf32>
    %230 = arith.mulf %229, %228 : vector<16x16xf32>
    %231 = arith.addf %225, %230 : vector<16x16xf32>
    %c36 = arith.constant 36 : index
    %232 = memref.load %arg2[%c36] : memref<98xf32, #tpu.memory_space<smem>>
    %c0_122 = arith.constant 0 : index
    %c5_123 = arith.constant 5 : index
    %c1_124 = arith.constant 1 : index
    %233 = vector.load %arg4[%c0_122, %c5_123, %c1_124] : memref<2x22x22xf32, #tpu.memory_space<vmem>>, vector<1x16x16xf32>
    %234 = vector.shape_cast %233 : vector<1x16x16xf32> to vector<16x16xf32>
    %235 = vector.broadcast %232 : f32 to vector<16x16xf32>
    %236 = arith.mulf %235, %234 : vector<16x16xf32>
    %237 = arith.addf %231, %236 : vector<16x16xf32>
    %c37 = arith.constant 37 : index
    %238 = memref.load %arg2[%c37] : memref<98xf32, #tpu.memory_space<smem>>
    %c0_125 = arith.constant 0 : index
    %c5_126 = arith.constant 5 : index
    %c2_127 = arith.constant 2 : index
    %239 = vector.load %arg4[%c0_125, %c5_126, %c2_127] : memref<2x22x22xf32, #tpu.memory_space<vmem>>, vector<1x16x16xf32>
    %240 = vector.shape_cast %239 : vector<1x16x16xf32> to vector<16x16xf32>
    %241 = vector.broadcast %238 : f32 to vector<16x16xf32>
    %242 = arith.mulf %241, %240 : vector<16x16xf32>
    %243 = arith.addf %237, %242 : vector<16x16xf32>
    %c38 = arith.constant 38 : index
    %244 = memref.load %arg2[%c38] : memref<98xf32, #tpu.memory_space<smem>>
    %c0_128 = arith.constant 0 : index
    %c5_129 = arith.constant 5 : index
    %c3_130 = arith.constant 3 : index
    %245 = vector.load %arg4[%c0_128, %c5_129, %c3_130] : memref<2x22x22xf32, #tpu.memory_space<vmem>>, vector<1x16x16xf32>
    %246 = vector.shape_cast %245 : vector<1x16x16xf32> to vector<16x16xf32>
    %247 = vector.broadcast %244 : f32 to vector<16x16xf32>
    %248 = arith.mulf %247, %246 : vector<16x16xf32>
    %249 = arith.addf %243, %248 : vector<16x16xf32>
    %c39 = arith.constant 39 : index
    %250 = memref.load %arg2[%c39] : memref<98xf32, #tpu.memory_space<smem>>
    %c0_131 = arith.constant 0 : index
    %c5_132 = arith.constant 5 : index
    %c4_133 = arith.constant 4 : index
    %251 = vector.load %arg4[%c0_131, %c5_132, %c4_133] : memref<2x22x22xf32, #tpu.memory_space<vmem>>, vector<1x16x16xf32>
    %252 = vector.shape_cast %251 : vector<1x16x16xf32> to vector<16x16xf32>
    %253 = vector.broadcast %250 : f32 to vector<16x16xf32>
    %254 = arith.mulf %253, %252 : vector<16x16xf32>
    %255 = arith.addf %249, %254 : vector<16x16xf32>
    %c40 = arith.constant 40 : index
    %256 = memref.load %arg2[%c40] : memref<98xf32, #tpu.memory_space<smem>>
    %c0_134 = arith.constant 0 : index
    %c5_135 = arith.constant 5 : index
    %c5_136 = arith.constant 5 : index
    %257 = vector.load %arg4[%c0_134, %c5_135, %c5_136] : memref<2x22x22xf32, #tpu.memory_space<vmem>>, vector<1x16x16xf32>
    %258 = vector.shape_cast %257 : vector<1x16x16xf32> to vector<16x16xf32>
    %259 = vector.broadcast %256 : f32 to vector<16x16xf32>
    %260 = arith.mulf %259, %258 : vector<16x16xf32>
    %261 = arith.addf %255, %260 : vector<16x16xf32>
    %c41 = arith.constant 41 : index
    %262 = memref.load %arg2[%c41] : memref<98xf32, #tpu.memory_space<smem>>
    %c0_137 = arith.constant 0 : index
    %c5_138 = arith.constant 5 : index
    %c6_139 = arith.constant 6 : index
    %263 = vector.load %arg4[%c0_137, %c5_138, %c6_139] : memref<2x22x22xf32, #tpu.memory_space<vmem>>, vector<1x16x16xf32>
    %264 = vector.shape_cast %263 : vector<1x16x16xf32> to vector<16x16xf32>
    %265 = vector.broadcast %262 : f32 to vector<16x16xf32>
    %266 = arith.mulf %265, %264 : vector<16x16xf32>
    %267 = arith.addf %261, %266 : vector<16x16xf32>
    %c42 = arith.constant 42 : index
    %268 = memref.load %arg2[%c42] : memref<98xf32, #tpu.memory_space<smem>>
    %c0_140 = arith.constant 0 : index
    %c6_141 = arith.constant 6 : index
    %c0_142 = arith.constant 0 : index
    %269 = vector.load %arg4[%c0_140, %c6_141, %c0_142] : memref<2x22x22xf32, #tpu.memory_space<vmem>>, vector<1x16x16xf32>
    %270 = vector.shape_cast %269 : vector<1x16x16xf32> to vector<16x16xf32>
    %271 = vector.broadcast %268 : f32 to vector<16x16xf32>
    %272 = arith.mulf %271, %270 : vector<16x16xf32>
    %273 = arith.addf %267, %272 : vector<16x16xf32>
    %c43 = arith.constant 43 : index
    %274 = memref.load %arg2[%c43] : memref<98xf32, #tpu.memory_space<smem>>
    %c0_143 = arith.constant 0 : index
    %c6_144 = arith.constant 6 : index
    %c1_145 = arith.constant 1 : index
    %275 = vector.load %arg4[%c0_143, %c6_144, %c1_145] : memref<2x22x22xf32, #tpu.memory_space<vmem>>, vector<1x16x16xf32>
    %276 = vector.shape_cast %275 : vector<1x16x16xf32> to vector<16x16xf32>
    %277 = vector.broadcast %274 : f32 to vector<16x16xf32>
    %278 = arith.mulf %277, %276 : vector<16x16xf32>
    %279 = arith.addf %273, %278 : vector<16x16xf32>
    %c44 = arith.constant 44 : index
    %280 = memref.load %arg2[%c44] : memref<98xf32, #tpu.memory_space<smem>>
    %c0_146 = arith.constant 0 : index
    %c6_147 = arith.constant 6 : index
    %c2_148 = arith.constant 2 : index
    %281 = vector.load %arg4[%c0_146, %c6_147, %c2_148] : memref<2x22x22xf32, #tpu.memory_space<vmem>>, vector<1x16x16xf32>
    %282 = vector.shape_cast %281 : vector<1x16x16xf32> to vector<16x16xf32>
    %283 = vector.broadcast %280 : f32 to vector<16x16xf32>
    %284 = arith.mulf %283, %282 : vector<16x16xf32>
    %285 = arith.addf %279, %284 : vector<16x16xf32>
    %c45 = arith.constant 45 : index
    %286 = memref.load %arg2[%c45] : memref<98xf32, #tpu.memory_space<smem>>
    %c0_149 = arith.constant 0 : index
    %c6_150 = arith.constant 6 : index
    %c3_151 = arith.constant 3 : index
    %287 = vector.load %arg4[%c0_149, %c6_150, %c3_151] : memref<2x22x22xf32, #tpu.memory_space<vmem>>, vector<1x16x16xf32>
    %288 = vector.shape_cast %287 : vector<1x16x16xf32> to vector<16x16xf32>
    %289 = vector.broadcast %286 : f32 to vector<16x16xf32>
    %290 = arith.mulf %289, %288 : vector<16x16xf32>
    %291 = arith.addf %285, %290 : vector<16x16xf32>
    %c46 = arith.constant 46 : index
    %292 = memref.load %arg2[%c46] : memref<98xf32, #tpu.memory_space<smem>>
    %c0_152 = arith.constant 0 : index
    %c6_153 = arith.constant 6 : index
    %c4_154 = arith.constant 4 : index
    %293 = vector.load %arg4[%c0_152, %c6_153, %c4_154] : memref<2x22x22xf32, #tpu.memory_space<vmem>>, vector<1x16x16xf32>
    %294 = vector.shape_cast %293 : vector<1x16x16xf32> to vector<16x16xf32>
    %295 = vector.broadcast %292 : f32 to vector<16x16xf32>
    %296 = arith.mulf %295, %294 : vector<16x16xf32>
    %297 = arith.addf %291, %296 : vector<16x16xf32>
    %c47 = arith.constant 47 : index
    %298 = memref.load %arg2[%c47] : memref<98xf32, #tpu.memory_space<smem>>
    %c0_155 = arith.constant 0 : index
    %c6_156 = arith.constant 6 : index
    %c5_157 = arith.constant 5 : index
    %299 = vector.load %arg4[%c0_155, %c6_156, %c5_157] : memref<2x22x22xf32, #tpu.memory_space<vmem>>, vector<1x16x16xf32>
    %300 = vector.shape_cast %299 : vector<1x16x16xf32> to vector<16x16xf32>
    %301 = vector.broadcast %298 : f32 to vector<16x16xf32>
    %302 = arith.mulf %301, %300 : vector<16x16xf32>
    %303 = arith.addf %297, %302 : vector<16x16xf32>
    %c48 = arith.constant 48 : index
    %304 = memref.load %arg2[%c48] : memref<98xf32, #tpu.memory_space<smem>>
    %c0_158 = arith.constant 0 : index
    %c6_159 = arith.constant 6 : index
    %c6_160 = arith.constant 6 : index
    %305 = vector.load %arg4[%c0_158, %c6_159, %c6_160] : memref<2x22x22xf32, #tpu.memory_space<vmem>>, vector<1x16x16xf32>
    %306 = vector.shape_cast %305 : vector<1x16x16xf32> to vector<16x16xf32>
    %307 = vector.broadcast %304 : f32 to vector<16x16xf32>
    %308 = arith.mulf %307, %306 : vector<16x16xf32>
    %309 = arith.addf %303, %308 : vector<16x16xf32>
    %c49 = arith.constant 49 : index
    %310 = memref.load %arg2[%c49] : memref<98xf32, #tpu.memory_space<smem>>
    %c1_161 = arith.constant 1 : index
    %c0_162 = arith.constant 0 : index
    %c0_163 = arith.constant 0 : index
    %311 = vector.load %arg4[%c1_161, %c0_162, %c0_163] : memref<2x22x22xf32, #tpu.memory_space<vmem>>, vector<1x16x16xf32>
    %312 = vector.shape_cast %311 : vector<1x16x16xf32> to vector<16x16xf32>
    %313 = vector.broadcast %310 : f32 to vector<16x16xf32>
    %314 = arith.mulf %313, %312 : vector<16x16xf32>
    %315 = arith.addf %309, %314 : vector<16x16xf32>
    %c50 = arith.constant 50 : index
    %316 = memref.load %arg2[%c50] : memref<98xf32, #tpu.memory_space<smem>>
    %c1_164 = arith.constant 1 : index
    %c0_165 = arith.constant 0 : index
    %c1_166 = arith.constant 1 : index
    %317 = vector.load %arg4[%c1_164, %c0_165, %c1_166] : memref<2x22x22xf32, #tpu.memory_space<vmem>>, vector<1x16x16xf32>
    %318 = vector.shape_cast %317 : vector<1x16x16xf32> to vector<16x16xf32>
    %319 = vector.broadcast %316 : f32 to vector<16x16xf32>
    %320 = arith.mulf %319, %318 : vector<16x16xf32>
    %321 = arith.addf %315, %320 : vector<16x16xf32>
    %c51 = arith.constant 51 : index
    %322 = memref.load %arg2[%c51] : memref<98xf32, #tpu.memory_space<smem>>
    %c1_167 = arith.constant 1 : index
    %c0_168 = arith.constant 0 : index
    %c2_169 = arith.constant 2 : index
    %323 = vector.load %arg4[%c1_167, %c0_168, %c2_169] : memref<2x22x22xf32, #tpu.memory_space<vmem>>, vector<1x16x16xf32>
    %324 = vector.shape_cast %323 : vector<1x16x16xf32> to vector<16x16xf32>
    %325 = vector.broadcast %322 : f32 to vector<16x16xf32>
    %326 = arith.mulf %325, %324 : vector<16x16xf32>
    %327 = arith.addf %321, %326 : vector<16x16xf32>
    %c52 = arith.constant 52 : index
    %328 = memref.load %arg2[%c52] : memref<98xf32, #tpu.memory_space<smem>>
    %c1_170 = arith.constant 1 : index
    %c0_171 = arith.constant 0 : index
    %c3_172 = arith.constant 3 : index
    %329 = vector.load %arg4[%c1_170, %c0_171, %c3_172] : memref<2x22x22xf32, #tpu.memory_space<vmem>>, vector<1x16x16xf32>
    %330 = vector.shape_cast %329 : vector<1x16x16xf32> to vector<16x16xf32>
    %331 = vector.broadcast %328 : f32 to vector<16x16xf32>
    %332 = arith.mulf %331, %330 : vector<16x16xf32>
    %333 = arith.addf %327, %332 : vector<16x16xf32>
    %c53 = arith.constant 53 : index
    %334 = memref.load %arg2[%c53] : memref<98xf32, #tpu.memory_space<smem>>
    %c1_173 = arith.constant 1 : index
    %c0_174 = arith.constant 0 : index
    %c4_175 = arith.constant 4 : index
    %335 = vector.load %arg4[%c1_173, %c0_174, %c4_175] : memref<2x22x22xf32, #tpu.memory_space<vmem>>, vector<1x16x16xf32>
    %336 = vector.shape_cast %335 : vector<1x16x16xf32> to vector<16x16xf32>
    %337 = vector.broadcast %334 : f32 to vector<16x16xf32>
    %338 = arith.mulf %337, %336 : vector<16x16xf32>
    %339 = arith.addf %333, %338 : vector<16x16xf32>
    %c54 = arith.constant 54 : index
    %340 = memref.load %arg2[%c54] : memref<98xf32, #tpu.memory_space<smem>>
    %c1_176 = arith.constant 1 : index
    %c0_177 = arith.constant 0 : index
    %c5_178 = arith.constant 5 : index
    %341 = vector.load %arg4[%c1_176, %c0_177, %c5_178] : memref<2x22x22xf32, #tpu.memory_space<vmem>>, vector<1x16x16xf32>
    %342 = vector.shape_cast %341 : vector<1x16x16xf32> to vector<16x16xf32>
    %343 = vector.broadcast %340 : f32 to vector<16x16xf32>
    %344 = arith.mulf %343, %342 : vector<16x16xf32>
    %345 = arith.addf %339, %344 : vector<16x16xf32>
    %c55 = arith.constant 55 : index
    %346 = memref.load %arg2[%c55] : memref<98xf32, #tpu.memory_space<smem>>
    %c1_179 = arith.constant 1 : index
    %c0_180 = arith.constant 0 : index
    %c6_181 = arith.constant 6 : index
    %347 = vector.load %arg4[%c1_179, %c0_180, %c6_181] : memref<2x22x22xf32, #tpu.memory_space<vmem>>, vector<1x16x16xf32>
    %348 = vector.shape_cast %347 : vector<1x16x16xf32> to vector<16x16xf32>
    %349 = vector.broadcast %346 : f32 to vector<16x16xf32>
    %350 = arith.mulf %349, %348 : vector<16x16xf32>
    %351 = arith.addf %345, %350 : vector<16x16xf32>
    %c56 = arith.constant 56 : index
    %352 = memref.load %arg2[%c56] : memref<98xf32, #tpu.memory_space<smem>>
    %c1_182 = arith.constant 1 : index
    %c1_183 = arith.constant 1 : index
    %c0_184 = arith.constant 0 : index
    %353 = vector.load %arg4[%c1_182, %c1_183, %c0_184] : memref<2x22x22xf32, #tpu.memory_space<vmem>>, vector<1x16x16xf32>
    %354 = vector.shape_cast %353 : vector<1x16x16xf32> to vector<16x16xf32>
    %355 = vector.broadcast %352 : f32 to vector<16x16xf32>
    %356 = arith.mulf %355, %354 : vector<16x16xf32>
    %357 = arith.addf %351, %356 : vector<16x16xf32>
    %c57 = arith.constant 57 : index
    %358 = memref.load %arg2[%c57] : memref<98xf32, #tpu.memory_space<smem>>
    %c1_185 = arith.constant 1 : index
    %c1_186 = arith.constant 1 : index
    %c1_187 = arith.constant 1 : index
    %359 = vector.load %arg4[%c1_185, %c1_186, %c1_187] : memref<2x22x22xf32, #tpu.memory_space<vmem>>, vector<1x16x16xf32>
    %360 = vector.shape_cast %359 : vector<1x16x16xf32> to vector<16x16xf32>
    %361 = vector.broadcast %358 : f32 to vector<16x16xf32>
    %362 = arith.mulf %361, %360 : vector<16x16xf32>
    %363 = arith.addf %357, %362 : vector<16x16xf32>
    %c58 = arith.constant 58 : index
    %364 = memref.load %arg2[%c58] : memref<98xf32, #tpu.memory_space<smem>>
    %c1_188 = arith.constant 1 : index
    %c1_189 = arith.constant 1 : index
    %c2_190 = arith.constant 2 : index
    %365 = vector.load %arg4[%c1_188, %c1_189, %c2_190] : memref<2x22x22xf32, #tpu.memory_space<vmem>>, vector<1x16x16xf32>
    %366 = vector.shape_cast %365 : vector<1x16x16xf32> to vector<16x16xf32>
    %367 = vector.broadcast %364 : f32 to vector<16x16xf32>
    %368 = arith.mulf %367, %366 : vector<16x16xf32>
    %369 = arith.addf %363, %368 : vector<16x16xf32>
    %c59 = arith.constant 59 : index
    %370 = memref.load %arg2[%c59] : memref<98xf32, #tpu.memory_space<smem>>
    %c1_191 = arith.constant 1 : index
    %c1_192 = arith.constant 1 : index
    %c3_193 = arith.constant 3 : index
    %371 = vector.load %arg4[%c1_191, %c1_192, %c3_193] : memref<2x22x22xf32, #tpu.memory_space<vmem>>, vector<1x16x16xf32>
    %372 = vector.shape_cast %371 : vector<1x16x16xf32> to vector<16x16xf32>
    %373 = vector.broadcast %370 : f32 to vector<16x16xf32>
    %374 = arith.mulf %373, %372 : vector<16x16xf32>
    %375 = arith.addf %369, %374 : vector<16x16xf32>
    %c60 = arith.constant 60 : index
    %376 = memref.load %arg2[%c60] : memref<98xf32, #tpu.memory_space<smem>>
    %c1_194 = arith.constant 1 : index
    %c1_195 = arith.constant 1 : index
    %c4_196 = arith.constant 4 : index
    %377 = vector.load %arg4[%c1_194, %c1_195, %c4_196] : memref<2x22x22xf32, #tpu.memory_space<vmem>>, vector<1x16x16xf32>
    %378 = vector.shape_cast %377 : vector<1x16x16xf32> to vector<16x16xf32>
    %379 = vector.broadcast %376 : f32 to vector<16x16xf32>
    %380 = arith.mulf %379, %378 : vector<16x16xf32>
    %381 = arith.addf %375, %380 : vector<16x16xf32>
    %c61 = arith.constant 61 : index
    %382 = memref.load %arg2[%c61] : memref<98xf32, #tpu.memory_space<smem>>
    %c1_197 = arith.constant 1 : index
    %c1_198 = arith.constant 1 : index
    %c5_199 = arith.constant 5 : index
    %383 = vector.load %arg4[%c1_197, %c1_198, %c5_199] : memref<2x22x22xf32, #tpu.memory_space<vmem>>, vector<1x16x16xf32>
    %384 = vector.shape_cast %383 : vector<1x16x16xf32> to vector<16x16xf32>
    %385 = vector.broadcast %382 : f32 to vector<16x16xf32>
    %386 = arith.mulf %385, %384 : vector<16x16xf32>
    %387 = arith.addf %381, %386 : vector<16x16xf32>
    %c62 = arith.constant 62 : index
    %388 = memref.load %arg2[%c62] : memref<98xf32, #tpu.memory_space<smem>>
    %c1_200 = arith.constant 1 : index
    %c1_201 = arith.constant 1 : index
    %c6_202 = arith.constant 6 : index
    %389 = vector.load %arg4[%c1_200, %c1_201, %c6_202] : memref<2x22x22xf32, #tpu.memory_space<vmem>>, vector<1x16x16xf32>
    %390 = vector.shape_cast %389 : vector<1x16x16xf32> to vector<16x16xf32>
    %391 = vector.broadcast %388 : f32 to vector<16x16xf32>
    %392 = arith.mulf %391, %390 : vector<16x16xf32>
    %393 = arith.addf %387, %392 : vector<16x16xf32>
    %c63 = arith.constant 63 : index
    %394 = memref.load %arg2[%c63] : memref<98xf32, #tpu.memory_space<smem>>
    %c1_203 = arith.constant 1 : index
    %c2_204 = arith.constant 2 : index
    %c0_205 = arith.constant 0 : index
    %395 = vector.load %arg4[%c1_203, %c2_204, %c0_205] : memref<2x22x22xf32, #tpu.memory_space<vmem>>, vector<1x16x16xf32>
    %396 = vector.shape_cast %395 : vector<1x16x16xf32> to vector<16x16xf32>
    %397 = vector.broadcast %394 : f32 to vector<16x16xf32>
    %398 = arith.mulf %397, %396 : vector<16x16xf32>
    %399 = arith.addf %393, %398 : vector<16x16xf32>
    %c64 = arith.constant 64 : index
    %400 = memref.load %arg2[%c64] : memref<98xf32, #tpu.memory_space<smem>>
    %c1_206 = arith.constant 1 : index
    %c2_207 = arith.constant 2 : index
    %c1_208 = arith.constant 1 : index
    %401 = vector.load %arg4[%c1_206, %c2_207, %c1_208] : memref<2x22x22xf32, #tpu.memory_space<vmem>>, vector<1x16x16xf32>
    %402 = vector.shape_cast %401 : vector<1x16x16xf32> to vector<16x16xf32>
    %403 = vector.broadcast %400 : f32 to vector<16x16xf32>
    %404 = arith.mulf %403, %402 : vector<16x16xf32>
    %405 = arith.addf %399, %404 : vector<16x16xf32>
    %c65 = arith.constant 65 : index
    %406 = memref.load %arg2[%c65] : memref<98xf32, #tpu.memory_space<smem>>
    %c1_209 = arith.constant 1 : index
    %c2_210 = arith.constant 2 : index
    %c2_211 = arith.constant 2 : index
    %407 = vector.load %arg4[%c1_209, %c2_210, %c2_211] : memref<2x22x22xf32, #tpu.memory_space<vmem>>, vector<1x16x16xf32>
    %408 = vector.shape_cast %407 : vector<1x16x16xf32> to vector<16x16xf32>
    %409 = vector.broadcast %406 : f32 to vector<16x16xf32>
    %410 = arith.mulf %409, %408 : vector<16x16xf32>
    %411 = arith.addf %405, %410 : vector<16x16xf32>
    %c66 = arith.constant 66 : index
    %412 = memref.load %arg2[%c66] : memref<98xf32, #tpu.memory_space<smem>>
    %c1_212 = arith.constant 1 : index
    %c2_213 = arith.constant 2 : index
    %c3_214 = arith.constant 3 : index
    %413 = vector.load %arg4[%c1_212, %c2_213, %c3_214] : memref<2x22x22xf32, #tpu.memory_space<vmem>>, vector<1x16x16xf32>
    %414 = vector.shape_cast %413 : vector<1x16x16xf32> to vector<16x16xf32>
    %415 = vector.broadcast %412 : f32 to vector<16x16xf32>
    %416 = arith.mulf %415, %414 : vector<16x16xf32>
    %417 = arith.addf %411, %416 : vector<16x16xf32>
    %c67 = arith.constant 67 : index
    %418 = memref.load %arg2[%c67] : memref<98xf32, #tpu.memory_space<smem>>
    %c1_215 = arith.constant 1 : index
    %c2_216 = arith.constant 2 : index
    %c4_217 = arith.constant 4 : index
    %419 = vector.load %arg4[%c1_215, %c2_216, %c4_217] : memref<2x22x22xf32, #tpu.memory_space<vmem>>, vector<1x16x16xf32>
    %420 = vector.shape_cast %419 : vector<1x16x16xf32> to vector<16x16xf32>
    %421 = vector.broadcast %418 : f32 to vector<16x16xf32>
    %422 = arith.mulf %421, %420 : vector<16x16xf32>
    %423 = arith.addf %417, %422 : vector<16x16xf32>
    %c68 = arith.constant 68 : index
    %424 = memref.load %arg2[%c68] : memref<98xf32, #tpu.memory_space<smem>>
    %c1_218 = arith.constant 1 : index
    %c2_219 = arith.constant 2 : index
    %c5_220 = arith.constant 5 : index
    %425 = vector.load %arg4[%c1_218, %c2_219, %c5_220] : memref<2x22x22xf32, #tpu.memory_space<vmem>>, vector<1x16x16xf32>
    %426 = vector.shape_cast %425 : vector<1x16x16xf32> to vector<16x16xf32>
    %427 = vector.broadcast %424 : f32 to vector<16x16xf32>
    %428 = arith.mulf %427, %426 : vector<16x16xf32>
    %429 = arith.addf %423, %428 : vector<16x16xf32>
    %c69 = arith.constant 69 : index
    %430 = memref.load %arg2[%c69] : memref<98xf32, #tpu.memory_space<smem>>
    %c1_221 = arith.constant 1 : index
    %c2_222 = arith.constant 2 : index
    %c6_223 = arith.constant 6 : index
    %431 = vector.load %arg4[%c1_221, %c2_222, %c6_223] : memref<2x22x22xf32, #tpu.memory_space<vmem>>, vector<1x16x16xf32>
    %432 = vector.shape_cast %431 : vector<1x16x16xf32> to vector<16x16xf32>
    %433 = vector.broadcast %430 : f32 to vector<16x16xf32>
    %434 = arith.mulf %433, %432 : vector<16x16xf32>
    %435 = arith.addf %429, %434 : vector<16x16xf32>
    %c70 = arith.constant 70 : index
    %436 = memref.load %arg2[%c70] : memref<98xf32, #tpu.memory_space<smem>>
    %c1_224 = arith.constant 1 : index
    %c3_225 = arith.constant 3 : index
    %c0_226 = arith.constant 0 : index
    %437 = vector.load %arg4[%c1_224, %c3_225, %c0_226] : memref<2x22x22xf32, #tpu.memory_space<vmem>>, vector<1x16x16xf32>
    %438 = vector.shape_cast %437 : vector<1x16x16xf32> to vector<16x16xf32>
    %439 = vector.broadcast %436 : f32 to vector<16x16xf32>
    %440 = arith.mulf %439, %438 : vector<16x16xf32>
    %441 = arith.addf %435, %440 : vector<16x16xf32>
    %c71 = arith.constant 71 : index
    %442 = memref.load %arg2[%c71] : memref<98xf32, #tpu.memory_space<smem>>
    %c1_227 = arith.constant 1 : index
    %c3_228 = arith.constant 3 : index
    %c1_229 = arith.constant 1 : index
    %443 = vector.load %arg4[%c1_227, %c3_228, %c1_229] : memref<2x22x22xf32, #tpu.memory_space<vmem>>, vector<1x16x16xf32>
    %444 = vector.shape_cast %443 : vector<1x16x16xf32> to vector<16x16xf32>
    %445 = vector.broadcast %442 : f32 to vector<16x16xf32>
    %446 = arith.mulf %445, %444 : vector<16x16xf32>
    %447 = arith.addf %441, %446 : vector<16x16xf32>
    %c72 = arith.constant 72 : index
    %448 = memref.load %arg2[%c72] : memref<98xf32, #tpu.memory_space<smem>>
    %c1_230 = arith.constant 1 : index
    %c3_231 = arith.constant 3 : index
    %c2_232 = arith.constant 2 : index
    %449 = vector.load %arg4[%c1_230, %c3_231, %c2_232] : memref<2x22x22xf32, #tpu.memory_space<vmem>>, vector<1x16x16xf32>
    %450 = vector.shape_cast %449 : vector<1x16x16xf32> to vector<16x16xf32>
    %451 = vector.broadcast %448 : f32 to vector<16x16xf32>
    %452 = arith.mulf %451, %450 : vector<16x16xf32>
    %453 = arith.addf %447, %452 : vector<16x16xf32>
    %c73 = arith.constant 73 : index
    %454 = memref.load %arg2[%c73] : memref<98xf32, #tpu.memory_space<smem>>
    %c1_233 = arith.constant 1 : index
    %c3_234 = arith.constant 3 : index
    %c3_235 = arith.constant 3 : index
    %455 = vector.load %arg4[%c1_233, %c3_234, %c3_235] : memref<2x22x22xf32, #tpu.memory_space<vmem>>, vector<1x16x16xf32>
    %456 = vector.shape_cast %455 : vector<1x16x16xf32> to vector<16x16xf32>
    %457 = vector.broadcast %454 : f32 to vector<16x16xf32>
    %458 = arith.mulf %457, %456 : vector<16x16xf32>
    %459 = arith.addf %453, %458 : vector<16x16xf32>
    %c74 = arith.constant 74 : index
    %460 = memref.load %arg2[%c74] : memref<98xf32, #tpu.memory_space<smem>>
    %c1_236 = arith.constant 1 : index
    %c3_237 = arith.constant 3 : index
    %c4_238 = arith.constant 4 : index
    %461 = vector.load %arg4[%c1_236, %c3_237, %c4_238] : memref<2x22x22xf32, #tpu.memory_space<vmem>>, vector<1x16x16xf32>
    %462 = vector.shape_cast %461 : vector<1x16x16xf32> to vector<16x16xf32>
    %463 = vector.broadcast %460 : f32 to vector<16x16xf32>
    %464 = arith.mulf %463, %462 : vector<16x16xf32>
    %465 = arith.addf %459, %464 : vector<16x16xf32>
    %c75 = arith.constant 75 : index
    %466 = memref.load %arg2[%c75] : memref<98xf32, #tpu.memory_space<smem>>
    %c1_239 = arith.constant 1 : index
    %c3_240 = arith.constant 3 : index
    %c5_241 = arith.constant 5 : index
    %467 = vector.load %arg4[%c1_239, %c3_240, %c5_241] : memref<2x22x22xf32, #tpu.memory_space<vmem>>, vector<1x16x16xf32>
    %468 = vector.shape_cast %467 : vector<1x16x16xf32> to vector<16x16xf32>
    %469 = vector.broadcast %466 : f32 to vector<16x16xf32>
    %470 = arith.mulf %469, %468 : vector<16x16xf32>
    %471 = arith.addf %465, %470 : vector<16x16xf32>
    %c76 = arith.constant 76 : index
    %472 = memref.load %arg2[%c76] : memref<98xf32, #tpu.memory_space<smem>>
    %c1_242 = arith.constant 1 : index
    %c3_243 = arith.constant 3 : index
    %c6_244 = arith.constant 6 : index
    %473 = vector.load %arg4[%c1_242, %c3_243, %c6_244] : memref<2x22x22xf32, #tpu.memory_space<vmem>>, vector<1x16x16xf32>
    %474 = vector.shape_cast %473 : vector<1x16x16xf32> to vector<16x16xf32>
    %475 = vector.broadcast %472 : f32 to vector<16x16xf32>
    %476 = arith.mulf %475, %474 : vector<16x16xf32>
    %477 = arith.addf %471, %476 : vector<16x16xf32>
    %c77 = arith.constant 77 : index
    %478 = memref.load %arg2[%c77] : memref<98xf32, #tpu.memory_space<smem>>
    %c1_245 = arith.constant 1 : index
    %c4_246 = arith.constant 4 : index
    %c0_247 = arith.constant 0 : index
    %479 = vector.load %arg4[%c1_245, %c4_246, %c0_247] : memref<2x22x22xf32, #tpu.memory_space<vmem>>, vector<1x16x16xf32>
    %480 = vector.shape_cast %479 : vector<1x16x16xf32> to vector<16x16xf32>
    %481 = vector.broadcast %478 : f32 to vector<16x16xf32>
    %482 = arith.mulf %481, %480 : vector<16x16xf32>
    %483 = arith.addf %477, %482 : vector<16x16xf32>
    %c78 = arith.constant 78 : index
    %484 = memref.load %arg2[%c78] : memref<98xf32, #tpu.memory_space<smem>>
    %c1_248 = arith.constant 1 : index
    %c4_249 = arith.constant 4 : index
    %c1_250 = arith.constant 1 : index
    %485 = vector.load %arg4[%c1_248, %c4_249, %c1_250] : memref<2x22x22xf32, #tpu.memory_space<vmem>>, vector<1x16x16xf32>
    %486 = vector.shape_cast %485 : vector<1x16x16xf32> to vector<16x16xf32>
    %487 = vector.broadcast %484 : f32 to vector<16x16xf32>
    %488 = arith.mulf %487, %486 : vector<16x16xf32>
    %489 = arith.addf %483, %488 : vector<16x16xf32>
    %c79 = arith.constant 79 : index
    %490 = memref.load %arg2[%c79] : memref<98xf32, #tpu.memory_space<smem>>
    %c1_251 = arith.constant 1 : index
    %c4_252 = arith.constant 4 : index
    %c2_253 = arith.constant 2 : index
    %491 = vector.load %arg4[%c1_251, %c4_252, %c2_253] : memref<2x22x22xf32, #tpu.memory_space<vmem>>, vector<1x16x16xf32>
    %492 = vector.shape_cast %491 : vector<1x16x16xf32> to vector<16x16xf32>
    %493 = vector.broadcast %490 : f32 to vector<16x16xf32>
    %494 = arith.mulf %493, %492 : vector<16x16xf32>
    %495 = arith.addf %489, %494 : vector<16x16xf32>
    %c80 = arith.constant 80 : index
    %496 = memref.load %arg2[%c80] : memref<98xf32, #tpu.memory_space<smem>>
    %c1_254 = arith.constant 1 : index
    %c4_255 = arith.constant 4 : index
    %c3_256 = arith.constant 3 : index
    %497 = vector.load %arg4[%c1_254, %c4_255, %c3_256] : memref<2x22x22xf32, #tpu.memory_space<vmem>>, vector<1x16x16xf32>
    %498 = vector.shape_cast %497 : vector<1x16x16xf32> to vector<16x16xf32>
    %499 = vector.broadcast %496 : f32 to vector<16x16xf32>
    %500 = arith.mulf %499, %498 : vector<16x16xf32>
    %501 = arith.addf %495, %500 : vector<16x16xf32>
    %c81 = arith.constant 81 : index
    %502 = memref.load %arg2[%c81] : memref<98xf32, #tpu.memory_space<smem>>
    %c1_257 = arith.constant 1 : index
    %c4_258 = arith.constant 4 : index
    %c4_259 = arith.constant 4 : index
    %503 = vector.load %arg4[%c1_257, %c4_258, %c4_259] : memref<2x22x22xf32, #tpu.memory_space<vmem>>, vector<1x16x16xf32>
    %504 = vector.shape_cast %503 : vector<1x16x16xf32> to vector<16x16xf32>
    %505 = vector.broadcast %502 : f32 to vector<16x16xf32>
    %506 = arith.mulf %505, %504 : vector<16x16xf32>
    %507 = arith.addf %501, %506 : vector<16x16xf32>
    %c82 = arith.constant 82 : index
    %508 = memref.load %arg2[%c82] : memref<98xf32, #tpu.memory_space<smem>>
    %c1_260 = arith.constant 1 : index
    %c4_261 = arith.constant 4 : index
    %c5_262 = arith.constant 5 : index
    %509 = vector.load %arg4[%c1_260, %c4_261, %c5_262] : memref<2x22x22xf32, #tpu.memory_space<vmem>>, vector<1x16x16xf32>
    %510 = vector.shape_cast %509 : vector<1x16x16xf32> to vector<16x16xf32>
    %511 = vector.broadcast %508 : f32 to vector<16x16xf32>
    %512 = arith.mulf %511, %510 : vector<16x16xf32>
    %513 = arith.addf %507, %512 : vector<16x16xf32>
    %c83 = arith.constant 83 : index
    %514 = memref.load %arg2[%c83] : memref<98xf32, #tpu.memory_space<smem>>
    %c1_263 = arith.constant 1 : index
    %c4_264 = arith.constant 4 : index
    %c6_265 = arith.constant 6 : index
    %515 = vector.load %arg4[%c1_263, %c4_264, %c6_265] : memref<2x22x22xf32, #tpu.memory_space<vmem>>, vector<1x16x16xf32>
    %516 = vector.shape_cast %515 : vector<1x16x16xf32> to vector<16x16xf32>
    %517 = vector.broadcast %514 : f32 to vector<16x16xf32>
    %518 = arith.mulf %517, %516 : vector<16x16xf32>
    %519 = arith.addf %513, %518 : vector<16x16xf32>
    %c84 = arith.constant 84 : index
    %520 = memref.load %arg2[%c84] : memref<98xf32, #tpu.memory_space<smem>>
    %c1_266 = arith.constant 1 : index
    %c5_267 = arith.constant 5 : index
    %c0_268 = arith.constant 0 : index
    %521 = vector.load %arg4[%c1_266, %c5_267, %c0_268] : memref<2x22x22xf32, #tpu.memory_space<vmem>>, vector<1x16x16xf32>
    %522 = vector.shape_cast %521 : vector<1x16x16xf32> to vector<16x16xf32>
    %523 = vector.broadcast %520 : f32 to vector<16x16xf32>
    %524 = arith.mulf %523, %522 : vector<16x16xf32>
    %525 = arith.addf %519, %524 : vector<16x16xf32>
    %c85 = arith.constant 85 : index
    %526 = memref.load %arg2[%c85] : memref<98xf32, #tpu.memory_space<smem>>
    %c1_269 = arith.constant 1 : index
    %c5_270 = arith.constant 5 : index
    %c1_271 = arith.constant 1 : index
    %527 = vector.load %arg4[%c1_269, %c5_270, %c1_271] : memref<2x22x22xf32, #tpu.memory_space<vmem>>, vector<1x16x16xf32>
    %528 = vector.shape_cast %527 : vector<1x16x16xf32> to vector<16x16xf32>
    %529 = vector.broadcast %526 : f32 to vector<16x16xf32>
    %530 = arith.mulf %529, %528 : vector<16x16xf32>
    %531 = arith.addf %525, %530 : vector<16x16xf32>
    %c86 = arith.constant 86 : index
    %532 = memref.load %arg2[%c86] : memref<98xf32, #tpu.memory_space<smem>>
    %c1_272 = arith.constant 1 : index
    %c5_273 = arith.constant 5 : index
    %c2_274 = arith.constant 2 : index
    %533 = vector.load %arg4[%c1_272, %c5_273, %c2_274] : memref<2x22x22xf32, #tpu.memory_space<vmem>>, vector<1x16x16xf32>
    %534 = vector.shape_cast %533 : vector<1x16x16xf32> to vector<16x16xf32>
    %535 = vector.broadcast %532 : f32 to vector<16x16xf32>
    %536 = arith.mulf %535, %534 : vector<16x16xf32>
    %537 = arith.addf %531, %536 : vector<16x16xf32>
    %c87 = arith.constant 87 : index
    %538 = memref.load %arg2[%c87] : memref<98xf32, #tpu.memory_space<smem>>
    %c1_275 = arith.constant 1 : index
    %c5_276 = arith.constant 5 : index
    %c3_277 = arith.constant 3 : index
    %539 = vector.load %arg4[%c1_275, %c5_276, %c3_277] : memref<2x22x22xf32, #tpu.memory_space<vmem>>, vector<1x16x16xf32>
    %540 = vector.shape_cast %539 : vector<1x16x16xf32> to vector<16x16xf32>
    %541 = vector.broadcast %538 : f32 to vector<16x16xf32>
    %542 = arith.mulf %541, %540 : vector<16x16xf32>
    %543 = arith.addf %537, %542 : vector<16x16xf32>
    %c88 = arith.constant 88 : index
    %544 = memref.load %arg2[%c88] : memref<98xf32, #tpu.memory_space<smem>>
    %c1_278 = arith.constant 1 : index
    %c5_279 = arith.constant 5 : index
    %c4_280 = arith.constant 4 : index
    %545 = vector.load %arg4[%c1_278, %c5_279, %c4_280] : memref<2x22x22xf32, #tpu.memory_space<vmem>>, vector<1x16x16xf32>
    %546 = vector.shape_cast %545 : vector<1x16x16xf32> to vector<16x16xf32>
    %547 = vector.broadcast %544 : f32 to vector<16x16xf32>
    %548 = arith.mulf %547, %546 : vector<16x16xf32>
    %549 = arith.addf %543, %548 : vector<16x16xf32>
    %c89 = arith.constant 89 : index
    %550 = memref.load %arg2[%c89] : memref<98xf32, #tpu.memory_space<smem>>
    %c1_281 = arith.constant 1 : index
    %c5_282 = arith.constant 5 : index
    %c5_283 = arith.constant 5 : index
    %551 = vector.load %arg4[%c1_281, %c5_282, %c5_283] : memref<2x22x22xf32, #tpu.memory_space<vmem>>, vector<1x16x16xf32>
    %552 = vector.shape_cast %551 : vector<1x16x16xf32> to vector<16x16xf32>
    %553 = vector.broadcast %550 : f32 to vector<16x16xf32>
    %554 = arith.mulf %553, %552 : vector<16x16xf32>
    %555 = arith.addf %549, %554 : vector<16x16xf32>
    %c90 = arith.constant 90 : index
    %556 = memref.load %arg2[%c90] : memref<98xf32, #tpu.memory_space<smem>>
    %c1_284 = arith.constant 1 : index
    %c5_285 = arith.constant 5 : index
    %c6_286 = arith.constant 6 : index
    %557 = vector.load %arg4[%c1_284, %c5_285, %c6_286] : memref<2x22x22xf32, #tpu.memory_space<vmem>>, vector<1x16x16xf32>
    %558 = vector.shape_cast %557 : vector<1x16x16xf32> to vector<16x16xf32>
    %559 = vector.broadcast %556 : f32 to vector<16x16xf32>
    %560 = arith.mulf %559, %558 : vector<16x16xf32>
    %561 = arith.addf %555, %560 : vector<16x16xf32>
    %c91 = arith.constant 91 : index
    %562 = memref.load %arg2[%c91] : memref<98xf32, #tpu.memory_space<smem>>
    %c1_287 = arith.constant 1 : index
    %c6_288 = arith.constant 6 : index
    %c0_289 = arith.constant 0 : index
    %563 = vector.load %arg4[%c1_287, %c6_288, %c0_289] : memref<2x22x22xf32, #tpu.memory_space<vmem>>, vector<1x16x16xf32>
    %564 = vector.shape_cast %563 : vector<1x16x16xf32> to vector<16x16xf32>
    %565 = vector.broadcast %562 : f32 to vector<16x16xf32>
    %566 = arith.mulf %565, %564 : vector<16x16xf32>
    %567 = arith.addf %561, %566 : vector<16x16xf32>
    %c92 = arith.constant 92 : index
    %568 = memref.load %arg2[%c92] : memref<98xf32, #tpu.memory_space<smem>>
    %c1_290 = arith.constant 1 : index
    %c6_291 = arith.constant 6 : index
    %c1_292 = arith.constant 1 : index
    %569 = vector.load %arg4[%c1_290, %c6_291, %c1_292] : memref<2x22x22xf32, #tpu.memory_space<vmem>>, vector<1x16x16xf32>
    %570 = vector.shape_cast %569 : vector<1x16x16xf32> to vector<16x16xf32>
    %571 = vector.broadcast %568 : f32 to vector<16x16xf32>
    %572 = arith.mulf %571, %570 : vector<16x16xf32>
    %573 = arith.addf %567, %572 : vector<16x16xf32>
    %c93 = arith.constant 93 : index
    %574 = memref.load %arg2[%c93] : memref<98xf32, #tpu.memory_space<smem>>
    %c1_293 = arith.constant 1 : index
    %c6_294 = arith.constant 6 : index
    %c2_295 = arith.constant 2 : index
    %575 = vector.load %arg4[%c1_293, %c6_294, %c2_295] : memref<2x22x22xf32, #tpu.memory_space<vmem>>, vector<1x16x16xf32>
    %576 = vector.shape_cast %575 : vector<1x16x16xf32> to vector<16x16xf32>
    %577 = vector.broadcast %574 : f32 to vector<16x16xf32>
    %578 = arith.mulf %577, %576 : vector<16x16xf32>
    %579 = arith.addf %573, %578 : vector<16x16xf32>
    %c94 = arith.constant 94 : index
    %580 = memref.load %arg2[%c94] : memref<98xf32, #tpu.memory_space<smem>>
    %c1_296 = arith.constant 1 : index
    %c6_297 = arith.constant 6 : index
    %c3_298 = arith.constant 3 : index
    %581 = vector.load %arg4[%c1_296, %c6_297, %c3_298] : memref<2x22x22xf32, #tpu.memory_space<vmem>>, vector<1x16x16xf32>
    %582 = vector.shape_cast %581 : vector<1x16x16xf32> to vector<16x16xf32>
    %583 = vector.broadcast %580 : f32 to vector<16x16xf32>
    %584 = arith.mulf %583, %582 : vector<16x16xf32>
    %585 = arith.addf %579, %584 : vector<16x16xf32>
    %c95 = arith.constant 95 : index
    %586 = memref.load %arg2[%c95] : memref<98xf32, #tpu.memory_space<smem>>
    %c1_299 = arith.constant 1 : index
    %c6_300 = arith.constant 6 : index
    %c4_301 = arith.constant 4 : index
    %587 = vector.load %arg4[%c1_299, %c6_300, %c4_301] : memref<2x22x22xf32, #tpu.memory_space<vmem>>, vector<1x16x16xf32>
    %588 = vector.shape_cast %587 : vector<1x16x16xf32> to vector<16x16xf32>
    %589 = vector.broadcast %586 : f32 to vector<16x16xf32>
    %590 = arith.mulf %589, %588 : vector<16x16xf32>
    %591 = arith.addf %585, %590 : vector<16x16xf32>
    %c96 = arith.constant 96 : index
    %592 = memref.load %arg2[%c96] : memref<98xf32, #tpu.memory_space<smem>>
    %c1_302 = arith.constant 1 : index
    %c6_303 = arith.constant 6 : index
    %c5_304 = arith.constant 5 : index
    %593 = vector.load %arg4[%c1_302, %c6_303, %c5_304] : memref<2x22x22xf32, #tpu.memory_space<vmem>>, vector<1x16x16xf32>
    %594 = vector.shape_cast %593 : vector<1x16x16xf32> to vector<16x16xf32>
    %595 = vector.broadcast %592 : f32 to vector<16x16xf32>
    %596 = arith.mulf %595, %594 : vector<16x16xf32>
    %597 = arith.addf %591, %596 : vector<16x16xf32>
    %c97 = arith.constant 97 : index
    %598 = memref.load %arg2[%c97] : memref<98xf32, #tpu.memory_space<smem>>
    %c1_305 = arith.constant 1 : index
    %c6_306 = arith.constant 6 : index
    %c6_307 = arith.constant 6 : index
    %599 = vector.load %arg4[%c1_305, %c6_306, %c6_307] : memref<2x22x22xf32, #tpu.memory_space<vmem>>, vector<1x16x16xf32>
    %600 = vector.shape_cast %599 : vector<1x16x16xf32> to vector<16x16xf32>
    %601 = vector.broadcast %598 : f32 to vector<16x16xf32>
    %602 = arith.mulf %601, %600 : vector<16x16xf32>
    %603 = arith.addf %597, %602 : vector<16x16xf32>
    %604 = arith.negf %603 : vector<16x16xf32>
    %605 = math.exp %604 : vector<16x16xf32>
    %cst_308 = arith.constant 1.000000e+00 : f32
    %606 = vector.broadcast %cst_308 : f32 to vector<16x16xf32>
    %607 = arith.addf %606, %605 : vector<16x16xf32>
    %608 = arith.divf %606, %607 : vector<16x16xf32>
    %c0_309 = arith.constant 0 : index
    %c0_310 = arith.constant 0 : index
    %c0_311 = arith.constant 0 : index
    %c0_312 = arith.constant 0 : index
    %609 = vector.load %arg3[%c0_309, %c0_310, %c0_311, %c0_312] : memref<1x1x16x16xf32, #tpu.memory_space<vmem>>, vector<1x1x16x16xf32>
    %610 = vector.shape_cast %609 : vector<1x1x16x16xf32> to vector<16x16xf32>
    %611 = vector.shape_cast %608 : vector<16x16xf32> to vector<1x1x16x16xf32>
    tpu.vector_store %arg3[%c0_309, %c0_310, %c0_311, %c0_312], %611 {strides = array<i32>} : memref<1x1x16x16xf32, #tpu.memory_space<vmem>>, vector<1x1x16x16xf32>,
    return
  }
  func.func @transform_0(%arg0: i32) -> (i32, i32, i32, i32) {
    %c0_i32 = arith.constant 0 : i32
    %c0_i32_0 = arith.constant 0 : i32
    %c0_i32_1 = arith.constant 0 : i32
    %c0_i32_2 = arith.constant 0 : i32
    return %arg0, %c0_i32, %c0_i32_0, %c0_i32_1 : i32, i32, i32, i32
  }
  func.func @transform_1(%arg0: i32) -> i32 {
    %c0_i32 = arith.constant 0 : i32
    %c0_i32_0 = arith.constant 0 : i32
    return %c0_i32 : i32
  }
  func.func @transform_2(%arg0: i32) -> (i32, i32, i32, i32) {
    %c0_i32 = arith.constant 0 : i32
    %c0_i32_0 = arith.constant 0 : i32
    %c0_i32_1 = arith.constant 0 : i32
    %c0_i32_2 = arith.constant 0 : i32
    return %arg0, %c0_i32, %c0_i32_0, %c0_i32_1 : i32, i32, i32, i32
  }
}

</mosaic_0001>

<llo_original>
// kernel: tpu_custom_call.1
$region0: #{tpu_custom_call.1}
  #allocation0 [shape = 'u32[]', space=smem, size = 0x4, offset = 0x4, fixed_abs, tag = 'smem constant byte address 0x4 - core index']
  #allocation1 [shape = 'u32[144,128]{1,0:T(1,128)}', space=vmem, size = 0x12000, scoped, tag = 'internal scratch']
  #allocation2 [shape = 'f32[2,22,22]{2,1,0:T(8,128)}', space=vmem, size = 0x6000, scoped, tag = 'scratch operand']
  %s0 = inlined_call_operand.hbm [shape: f32[2,4,16,16], index: 0, kind: input, shape index: {}]
  %s1 = inlined_call_operand.vmem [shape: f32[98], index: 1, kind: input, shape index: {}]
  %s2 = inlined_call_operand.hbm [shape: f32[2,1,16,16], index: 2, kind: output, shape index: {}]
  %s3 = sld [smem:[#allocation0]]
  $region53: #{tpu_custom_call.1} parent=0
    _
  %s5 = ssub.s32 1, %s3
  %s6 = scalar_select 0, %s5, %s3
  $region1: #{tpu_custom_call.1} parent=0
    #allocation3 [shape = 'u8[65536]{0}', space=vmem, size = 0x10000, scoped, tag = 'input window, operand 0']
    #allocation4 [shape = 's32[2]{0}', space=sflag, size = 0x8, scoped, tag = 'scoped memory for tpu_custom_call.1']
    #allocation5 [shape = 's32[2]{0}', space=sflag, size = 0x8, scoped, tag = 'scoped memory for tpu_custom_call.1']
    #allocation6 [shape = 's32[2]{0}', space=sflag, size = 0x8, scoped, tag = 'scoped memory for tpu_custom_call.1']
    #allocation7 [shape = 'u8[512]{0}', space=smem, size = 0x200, scoped, tag = 'input window, operand 1, single buffered']
    #allocation8 [shape = 'u8[16384]{0}', space=vmem, size = 0x4000, scoped, tag = 'output window, operand 0']
    %7 = vsyncpa [#allocation4], 0
    %s8 = scalar_lea.sflag [#allocation4], 1
    %9 = vsyncpa %s8, 0
    %10 = vsyncpa [#allocation6], 0
    %11 = vsyncpa [#allocation5], 0
    %s12 = scalar_lea.sflag [#allocation5], 1
    %13 = vsyncpa %s12, 0
    loop: start=0, step=1, limit=4
    $region2: #{tpu_custom_call.1} parent=1 // loop_pre_header
      _
    $region3: #{tpu_custom_call.1} parent=1 // loop_header
      %s15 = sphi 0, %s19
      %p16 = scmp.ge.s32.totalorder %s15, 4
      %s25 = sphi 0, %s27
      %s28 = sphi 0, %s25
      %s29 = sphi 0, %s28
      %s45 = sphi 0, %s29
      %s49 = sphi 0, %s49
      %s51 = sphi 0, %s49
      %s52 = sphi 0, %s51
      %s66 = sphi 0, %s52
      %s72 = sphi 0, %s74
      %s75 = sphi 0, %s72
      %s76 = sphi 0, %s75
      %s92 = sphi 0, %s76
    $region4: #{tpu_custom_call.1} parent=1 // loop_header_branch
      %18 = sbr.rel (%p16) target = $region8
    $region5: #{tpu_custom_call.1} parent=1 // loop_body
      %s20 = ssub.s32 %s15, 1
      %s21 = ssub.s32 %s15, 2
      %s22 = sadd.s32 %s15, 1
      %s23 = ssub.s32 %s15, %s22
      %p24 = scmp.eq.s32.totalorder %s23, 0
      %s26 = sadd.s32 %s25, 1
      %s27 = scalar_select %p24, %s25, %s26
      %p30 = pneg %p24
      %p31 = scmp.eq.s32.totalorder %s15, 1
      %p32 = por %p30, %p31
      %p33 = scmp.ne.s32.totalorder %s25, %s28
      %p34 = scmp.eq.s32.totalorder %s15, 0
      %p35 = por %p33, %p34
      %p36 = scmp.ne.s32.totalorder %s25, %s28
      %p37 = scmp.eq.s32.totalorder %s20, 1
      %p38 = por %p36, %p37
      %p39 = scmp.ne.s32.totalorder %s28, %s29
      %p40 = scmp.eq.s32.totalorder %s20, 0
      %p41 = por %p39, %p40
      %p42 = scmp.ne.s32.totalorder %s28, %s29
      %p43 = scmp.eq.s32.totalorder %s21, 1
      %p44 = por %p42, %p43
      %p46 = scmp.ne.s32.totalorder %s29, %s45
      %p47 = scmp.eq.s32.totalorder %s21, 0
      %p48 = por %p46, %p47
      %s50 = sadd.s32 %s49, 1
      %p53 = scmp.eq.s32.totalorder %s15, 1
      %p54 = scmp.ne.s32.totalorder %s49, %s51
      %p55 = scmp.eq.s32.totalorder %s15, 0
      %p56 = por %p54, %p55
      %p57 = scmp.ne.s32.totalorder %s49, %s51
      %p58 = scmp.eq.s32.totalorder %s20, 1
      %p59 = por %p57, %p58
      %p60 = scmp.ne.s32.totalorder %s51, %s52
      %p61 = scmp.eq.s32.totalorder %s20, 0
      %p62 = por %p60, %p61
      %p63 = scmp.ne.s32.totalorder %s51, %s52
      %p64 = scmp.eq.s32.totalorder %s21, 1
      %p65 = por %p63, %p64
      %p67 = scmp.ne.s32.totalorder %s52, %s66
      %p68 = scmp.eq.s32.totalorder %s21, 0
      %p69 = por %p67, %p68
      %s70 = ssub.s32 %s15, %s22
      %p71 = scmp.eq.s32.totalorder %s70, 0
      %s73 = sadd.s32 %s72, 1
      %s74 = scalar_select %p71, %s72, %s73
      %p77 = pneg %p71
      %p78 = scmp.eq.s32.totalorder %s15, 1
      %p79 = por %p77, %p78
      %p80 = scmp.ne.s32.totalorder %s72, %s75
      %p81 = scmp.eq.s32.totalorder %s15, 0
      %p82 = por %p80, %p81
      %p83 = scmp.ne.s32.totalorder %s72, %s75
      %p84 = scmp.eq.s32.totalorder %s20, 1
      %p85 = por %p83, %p84
      %p86 = scmp.ne.s32.totalorder %s75, %s76
      %p87 = scmp.eq.s32.totalorder %s20, 0
      %p88 = por %p86, %p87
      %p89 = scmp.ne.s32.totalorder %s75, %s76
      %p90 = scmp.eq.s32.totalorder %s21, 1
      %p91 = por %p89, %p90
      %p93 = scmp.ne.s32.totalorder %s76, %s92
      %p94 = scmp.eq.s32.totalorder %s21, 0
      %p95 = por %p93, %p94
      %p96 = scmp.le.s32.totalorder 1, %s15
      %p97 = scmp.lt.s32.totalorder %s15, 3
      %p98 = pnand %p96, %p97
      %p99 = pneg %p98
      // Predicated region
      $region9: #{tpu_custom_call.1} parent=5 // pred_check
        _
      $region10: #{tpu_custom_call.1} parent=5 // pred_check_branch
        %101 = sbr.rel (%p98) target = $region12
      $region11: #{tpu_custom_call.1} parent=5 // pred_region
        %s102 = ssub.s32 %s15, 1
        // Predicated region
        $region13: #{tpu_custom_call.1} parent=11 // pred_check
          %p103 = pneg %p62
        $region14: #{tpu_custom_call.1} parent=11 // pred_check_branch
          %105 = sbr.rel (%p103) target = $region16
        $region15: #{tpu_custom_call.1} parent=11 // pred_region
          %s107 = ssub.s32 16, 16
          %108 = vsyncadd [#allocation6], %s107
          %s110 = sshll.u32 %s1, 4
          %s111 = int_to_ptr.vmem [resolvable:$true] %s110
          %113 = dma.vmem_to_smem %s111, 16, [#allocation7], [#allocation6]
        $region16: #{tpu_custom_call.1} parent=11 // pred_fallthru
          _
      $region12: #{tpu_custom_call.1} parent=5 // pred_fallthru
        _
      %p114 = scmp.lt.s32.totalorder %s15, 2
      // Predicated region
      $region17: #{tpu_custom_call.1} parent=5 // pred_check
        %p115 = pneg %p114
      $region18: #{tpu_custom_call.1} parent=5 // pred_check_branch
        %117 = sbr.rel (%p115) target = $region20
      $region19: #{tpu_custom_call.1} parent=5 // pred_region
        // Predicated region
        $region21: #{tpu_custom_call.1} parent=19 // pred_check
          %p118 = pneg %p35
        $region22: #{tpu_custom_call.1} parent=19 // pred_check_branch
          %120 = sbr.rel (%p118) target = $region24
        $region23: #{tpu_custom_call.1} parent=19 // pred_region
          %s121 = sand.u32 %s25, 1
          %s122 = scalar_lea.sflag [#allocation4], %s121
          %s123 = sand.u32 %s25, 1
          %s124 = smul.addr %s123, 64
          %s125 = scalar_lea.vmem [#allocation3], %s124
          %s127 = ssub.s32 1024, 1024
          %128 = vsyncadd %s122, %s127
          %s129 = smul.addr %s15, 8
          %s130 = smul.addr %s129, 128
          %s131 = scalar_lea.hbm %s0, %s130
          %s132 = sshll.u32 %s125, 4
          %s133 = int_to_ptr.vmem [resolvable:$true] %s132
          %138 = dma.hbm_to_vmem [thread:$0]  %s131, 1024, %s133, %s122, 128, 128, 8
        $region24: #{tpu_custom_call.1} parent=19 // pred_fallthru
          _
      $region20: #{tpu_custom_call.1} parent=5 // pred_fallthru
        _
      %p139 = scmp.le.s32.totalorder 1, %s15
      %p140 = scmp.lt.s32.totalorder %s15, 3
      %p141 = pnand %p139, %p140
      %p142 = pneg %p141
      // Predicated region
      $region25: #{tpu_custom_call.1} parent=5 // pred_check
        _
      $region26: #{tpu_custom_call.1} parent=5 // pred_check_branch
        %144 = sbr.rel (%p141) target = $region28
      $region27: #{tpu_custom_call.1} parent=5 // pred_region
        %s145 = ssub.s32 %s15, 1
        %s146 = sand.u32 %s28, 1
        %s147 = scalar_lea.sflag [#allocation4], %s146
        %s148 = sand.u32 %s28, 1
        %s149 = smul.addr %s148, 64
        %s150 = scalar_lea.vmem [#allocation3], %s149
        // Predicated region
        $region29: #{tpu_custom_call.1} parent=27 // pred_check
          %p151 = pneg %p41
        $region30: #{tpu_custom_call.1} parent=27 // pred_check_branch
          %153 = sbr.rel (%p151) target = $region32
        $region31: #{tpu_custom_call.1} parent=27 // pred_region
          %154 = dma.done %s147, 1024
        $region32: #{tpu_custom_call.1} parent=27 // pred_fallthru
          _
        // Predicated region
        $region33: #{tpu_custom_call.1} parent=27 // pred_check
          %p155 = pneg %p62
        $region34: #{tpu_custom_call.1} parent=27 // pred_check_branch
          %157 = sbr.rel (%p155) target = $region36
        $region35: #{tpu_custom_call.1} parent=27 // pred_region
          %158 = dma.done [#allocation6], 16
        $region36: #{tpu_custom_call.1} parent=27 // pred_fallthru
          _
        %159 = sfence
        %s160 = sand.u32 %s28, 1
        %s161 = scalar_lea.sflag [#allocation4], %s160
        %s162 = sand.u32 %s28, 1
        %s163 = smul.addr %s162, 64
        %s164 = scalar_lea.vmem [#allocation3], %s163
        %p165 = pneg %p41
        %p166 = pneg %p38
        %p167 = pneg %p62
        %p168 = pneg %p59
        %p169 = pneg %p88
        %p170 = pneg %p85
        %s171 = sand.u32 %s75, 1
        %s172 = scalar_lea.sflag [#allocation5], %s171
        %s173 = sand.u32 %s75, 1
        %s174 = smul.addr %s173, 16
        %s175 = scalar_lea.vmem [#allocation8], %s174
        %v176 = vld [vmem:[%s150] sm:$0xff]
        %v177 = vld [vmem:[%s150 + $0x8] sm:$0xff]
        %v178 = vld [vmem:[%s150 + $0x10] sm:$0xff]
        %v179 = vld [vmem:[%s150 + $0x18] sm:$0xff]
        %v180 = vld [vmem:[%s150 + $0x20] sm:$0xff]
        %v181 = vld [vmem:[%s150 + $0x28] sm:$0xff]
        %v182 = vld [vmem:[%s150 + $0x30] sm:$0xff]
        %v183 = vld [vmem:[%s150 + $0x38] sm:$0xff]
        %vm184 = vcmask 130048
        %v185 = vsel %vm184, %v176, 0.0
        %v186 = vsel %vm184, %v178, 0.0
        %v187 = vadd.f32 %v185, %v186
        %v188 = vsel %vm184, %v180, 0.0
        %v189 = vadd.f32 %v187, %v188
        %v190 = vsel %vm184, %v182, 0.0
        %v191 = vadd.f32 %v189, %v190
        %v192 = vsel %vm184, %v177, 0.0
        %v193 = vsel %vm184, %v179, 0.0
        %v194 = vadd.f32 %v192, %v193
        %v195 = vsel %vm184, %v181, 0.0
        %v196 = vadd.f32 %v194, %v195
        %v197 = vsel %vm184, %v183, 0.0
        %v198 = vadd.f32 %v196, %v197
        %v199 = vmul.f32 %v191, 0.25
        %v200 = vmul.f32 %v198, 0.25
        %v201 = vsel %vm184, %v176, -inf
        %v202 = vsel %vm184, %v178, -inf
        %v203 = vsel %vm184, %v180, -inf
        %v204 = vmax.f32 %v201, %v203
        %v205 = vsel %vm184, %v182, -inf
        %v206 = vmax.f32 %v202, %v205
        %v207 = vmax.f32 %v204, %v206
        %v208 = vsel %vm184, %v177, -inf
        %v209 = vsel %vm184, %v179, -inf
        %v210 = vsel %vm184, %v181, -inf
        %v211 = vmax.f32 %v208, %v210
        %v212 = vsel %vm184, %v183, -inf
        %v213 = vmax.f32 %v209, %v212
        %v214 = vmax.f32 %v211, %v213
        %p215 = scmp.eq.s32.totalorder %s20, 0
        // Predicated region
        $region37: #{tpu_custom_call.1} parent=27 // pred_check
          %p216 = pneg %p215
        $region38: #{tpu_custom_call.1} parent=27 // pred_check_branch
          %218 = sbr.rel (%p216) target = $region40
        $region39: #{tpu_custom_call.1} parent=27 // pred_region
          %vm219 = vcmask 179200
          %220 = vst.msk [vmem:[#allocation2] sm:$0xff] %vm219, 0.0
          %221 = vst.msk [vmem:[#allocation2 + $0x8] sm:$0xff] %vm219, 0.0
          %vm222 = vcmask 177152
          %223 = vst.msk [vmem:[#allocation2 + $0x10] sm:$0x3f] %vm222, 0.0
          %224 = vst.msk [vmem:[#allocation2 + $0x18] sm:$0xff] %vm219, 0.0
          %225 = vst.msk [vmem:[#allocation2 + $0x20] sm:$0xff] %vm219, 0.0
          %226 = vst.msk [vmem:[#allocation2 + $0x28] sm:$0x3f] %vm222, 0.0
        $region40: #{tpu_custom_call.1} parent=27 // pred_fallthru
          _
        %229 = vrot.lane.b32.xlu0 %v199, 3
        %v230 = vpop.permute.xlu0 %229
        %231 = vrot.lane.b32.xlu0 %v200, 3
        %v232 = vpop.permute.xlu0 %231
        %vm235 = vcmask 154648
        %236 = vst.msk [vmem:[#allocation2 + $0x3] sm:$0xff] %vm235, %v230
        %237 = vst.msk [vmem:[#allocation2 + $0xb] sm:$0xff] %vm235, %v232
        %240 = vrot.lane.b32.xlu0 %v207, 3
        %v241 = vpop.permute.xlu0 %240
        %242 = vrot.lane.b32.xlu0 %v214, 3
        %v243 = vpop.permute.xlu0 %242
        %s246 = scalar_lea.vmem [#allocation2], 24
        %247 = vst.msk [vmem:[%s246 + $0x3] sm:$0xff] %vm235, %v241
        %248 = vst.msk [vmem:[%s246 + $0xb] sm:$0xff] %vm235, %v243
        %s249 = sld [smem:[#allocation7]]
        %v250 = vld [vmem:[#allocation2] sm:$0xff]
        %v251 = vld [vmem:[#allocation2 + $0x8] sm:$0xff]
        %v252 = vstv %s249
        %v253 = vmul.f32 %v252, %v250
        %v254 = vmul.f32 %v252, %v251
        %v255 = vadd.f32 %v253, 0.0
        %v256 = vadd.f32 %v254, 0.0
        %s257 = sld [smem:[#allocation7 + $0x1]]
        %v258 = vstv %s257
        %v259 = vmul.f32 %v258, %v250
        %v260 = vmul.f32 %v258, %v251
        %263 = vrot.lane.b32.xlu0 %v259, 127
        %v264 = vpop.permute.xlu0 %263
        %265 = vrot.lane.b32.xlu0 %v260, 127
        %v266 = vpop.permute.xlu0 %265
        %v269 = vadd.f32 %v255, %v264
        %v270 = vadd.f32 %v256, %v266
        %s271 = sld [smem:[#allocation7 + $0x2]]
        %v272 = vstv %s271
        %v273 = vmul.f32 %v272, %v250
        %v274 = vmul.f32 %v272, %v251
        %277 = vrot.lane.b32.xlu0 %v273, 126
        %v278 = vpop.permute.xlu0 %277
        %279 = vrot.lane.b32.xlu0 %v274, 126
        %v280 = vpop.permute.xlu0 %279
        %v283 = vadd.f32 %v269, %v278
        %v284 = vadd.f32 %v270, %v280
        %s285 = sld [smem:[#allocation7 + $0x3]]
        %v286 = vstv %s285
        %v287 = vmul.f32 %v286, %v250
        %v288 = vmul.f32 %v286, %v251
        %291 = vrot.lane.b32.xlu0 %v287, 125
        %v292 = vpop.permute.xlu0 %291
        %293 = vrot.lane.b32.xlu0 %v288, 125
        %v294 = vpop.permute.xlu0 %293
        %v297 = vadd.f32 %v283, %v292
        %v298 = vadd.f32 %v284, %v294
        %s299 = sld [smem:[#allocation7 + $0x4]]
        %v300 = vstv %s299
        %v301 = vmul.f32 %v300, %v250
        %v302 = vmul.f32 %v300, %v251
        %305 = vrot.lane.b32.xlu0 %v301, 124
        %v306 = vpop.permute.xlu0 %305
        %307 = vrot.lane.b32.xlu0 %v302, 124
        %v308 = vpop.permute.xlu0 %307
        %v311 = vadd.f32 %v297, %v306
        %v312 = vadd.f32 %v298, %v308
        %s313 = sld [smem:[#allocation7 + $0x5]]
        %v314 = vstv %s313
        %v315 = vmul.f32 %v314, %v250
        %v316 = vmul.f32 %v314, %v251
        %319 = vrot.lane.b32.xlu0 %v315, 123
        %v320 = vpop.permute.xlu0 %319
        %321 = vrot.lane.b32.xlu0 %v316, 123
        %v322 = vpop.permute.xlu0 %321
        %v325 = vadd.f32 %v311, %v320
        %v326 = vadd.f32 %v312, %v322
        %s327 = sld [smem:[#allocation7 + $0x6]]
        %v328 = vstv %s327
        %v329 = vmul.f32 %v328, %v250
        %v330 = vmul.f32 %v328, %v251
        %333 = vrot.lane.b32.xlu0 %v329, 122
        %v334 = vpop.permute.xlu0 %333
        %335 = vrot.lane.b32.xlu0 %v330, 122
        %v336 = vpop.permute.xlu0 %335
        %v339 = vadd.f32 %v325, %v334
        %v340 = vadd.f32 %v326, %v336
        %s341 = sld [smem:[#allocation7 + $0x7]]
        %v342 = vld [vmem:[#allocation2 + $0x1] sm:$0xff]
        %v343 = vld [vmem:[#allocation2 + $0x9] sm:$0xff]
        %v344 = vstv %s341
        %v345 = vmul.f32 %v344, %v342
        %v346 = vmul.f32 %v344, %v343
        %v347 = vadd.f32 %v339, %v345
        %v348 = vadd.f32 %v340, %v346
        %s349 = sld [smem:[#allocation7 + $0x8]]
        %v350 = vstv %s349
        %v351 = vmul.f32 %v350, %v342
        %v352 = vmul.f32 %v350, %v343
        %355 = vrot.lane.b32.xlu0 %v351, 127
        %v356 = vpop.permute.xlu0 %355
        %357 = vrot.lane.b32.xlu0 %v352, 127
        %v358 = vpop.permute.xlu0 %357
        %v361 = vadd.f32 %v347, %v356
        %v362 = vadd.f32 %v348, %v358
        %s363 = sld [smem:[#allocation7 + $0x9]]
        %v364 = vstv %s363
        %v365 = vmul.f32 %v364, %v342
        %v366 = vmul.f32 %v364, %v343
        %369 = vrot.lane.b32.xlu0 %v365, 126
        %v370 = vpop.permute.xlu0 %369
        %371 = vrot.lane.b32.xlu0 %v366, 126
        %v372 = vpop.permute.xlu0 %371
        %v375 = vadd.f32 %v361, %v370
        %v376 = vadd.f32 %v362, %v372
        %s377 = sld [smem:[#allocation7 + $0xa]]
        %v378 = vstv %s377
        %v379 = vmul.f32 %v378, %v342
        %v380 = vmul.f32 %v378, %v343
        %383 = vrot.lane.b32.xlu0 %v379, 125
        %v384 = vpop.permute.xlu0 %383
        %385 = vrot.lane.b32.xlu0 %v380, 125
        %v386 = vpop.permute.xlu0 %385
        %v389 = vadd.f32 %v375, %v384
        %v390 = vadd.f32 %v376, %v386
        %s391 = sld [smem:[#allocation7 + $0xb]]
        %v392 = vstv %s391
        %v393 = vmul.f32 %v392, %v342
        %v394 = vmul.f32 %v392, %v343
        %397 = vrot.lane.b32.xlu0 %v393, 124
        %v398 = vpop.permute.xlu0 %397
        %399 = vrot.lane.b32.xlu0 %v394, 124
        %v400 = vpop.permute.xlu0 %399
        %v403 = vadd.f32 %v389, %v398
        %v404 = vadd.f32 %v390, %v400
        %s405 = sld [smem:[#allocation7 + $0xc]]
        %v406 = vstv %s405
        %v407 = vmul.f32 %v406, %v342
        %v408 = vmul.f32 %v406, %v343
        %411 = vrot.lane.b32.xlu0 %v407, 123
        %v412 = vpop.permute.xlu0 %411
        %413 = vrot.lane.b32.xlu0 %v408, 123
        %v414 = vpop.permute.xlu0 %413
        %v417 = vadd.f32 %v403, %v412
        %v418 = vadd.f32 %v404, %v414
        %s419 = sld [smem:[#allocation7 + $0xd]]
        %v420 = vstv %s419
        %v421 = vmul.f32 %v420, %v342
        %v422 = vmul.f32 %v420, %v343
        %425 = vrot.lane.b32.xlu0 %v421, 122
        %v426 = vpop.permute.xlu0 %425
        %427 = vrot.lane.b32.xlu0 %v422, 122
        %v428 = vpop.permute.xlu0 %427
        %v431 = vadd.f32 %v417, %v426
        %v432 = vadd.f32 %v418, %v428
        %s433 = sld [smem:[#allocation7 + $0xe]]
        %v434 = vld [vmem:[#allocation2 + $0x2] sm:$0xff]
        %v435 = vld [vmem:[#allocation2 + $0xa] sm:$0xff]
        %v436 = vstv %s433
        %v437 = vmul.f32 %v436, %v434
        %v438 = vmul.f32 %v436, %v435
        %v439 = vadd.f32 %v431, %v437
        %v440 = vadd.f32 %v432, %v438
        %s441 = sld [smem:[#allocation7 + $0xf]]
        %v442 = vstv %s441
        %v443 = vmul.f32 %v442, %v434
        %v444 = vmul.f32 %v442, %v435
        %447 = vrot.lane.b32.xlu0 %v443, 127
        %v448 = vpop.permute.xlu0 %447
        %449 = vrot.lane.b32.xlu0 %v444, 127
        %v450 = vpop.permute.xlu0 %449
        %v453 = vadd.f32 %v439, %v448
        %v454 = vadd.f32 %v440, %v450
        %s455 = sld [smem:[#allocation7 + $0x10]]
        %v456 = vstv %s455
        %v457 = vmul.f32 %v456, %v434
        %v458 = vmul.f32 %v456, %v435
        %461 = vrot.lane.b32.xlu0 %v457, 126
        %v462 = vpop.permute.xlu0 %461
        %463 = vrot.lane.b32.xlu0 %v458, 126
        %v464 = vpop.permute.xlu0 %463
        %v467 = vadd.f32 %v453, %v462
        %v468 = vadd.f32 %v454, %v464
        %s469 = sld [smem:[#allocation7 + $0x11]]
        %v470 = vstv %s469
        %v471 = vmul.f32 %v470, %v434
        %v472 = vmul.f32 %v470, %v435
        %475 = vrot.lane.b32.xlu0 %v471, 125
        %v476 = vpop.permute.xlu0 %475
        %477 = vrot.lane.b32.xlu0 %v472, 125
        %v478 = vpop.permute.xlu0 %477
        %v481 = vadd.f32 %v467, %v476
        %v482 = vadd.f32 %v468, %v478
        %s483 = sld [smem:[#allocation7 + $0x12]]
        %v484 = vstv %s483
        %v485 = vmul.f32 %v484, %v434
        %v486 = vmul.f32 %v484, %v435
        %489 = vrot.lane.b32.xlu0 %v485, 124
        %v490 = vpop.permute.xlu0 %489
        %491 = vrot.lane.b32.xlu0 %v486, 124
        %v492 = vpop.permute.xlu0 %491
        %v495 = vadd.f32 %v481, %v490
        %v496 = vadd.f32 %v482, %v492
        %s497 = sld [smem:[#allocation7 + $0x13]]
        %v498 = vstv %s497
        %v499 = vmul.f32 %v498, %v434
        %v500 = vmul.f32 %v498, %v435
        %503 = vrot.lane.b32.xlu0 %v499, 123
        %v504 = vpop.permute.xlu0 %503
        %505 = vrot.lane.b32.xlu0 %v500, 123
        %v506 = vpop.permute.xlu0 %505
        %v509 = vadd.f32 %v495, %v504
        %v510 = vadd.f32 %v496, %v506
        %s511 = sld [smem:[#allocation7 + $0x14]]
        %v512 = vstv %s511
        %v513 = vmul.f32 %v512, %v434
        %v514 = vmul.f32 %v512, %v435
        %517 = vrot.lane.b32.xlu0 %v513, 122
        %v518 = vpop.permute.xlu0 %517
        %519 = vrot.lane.b32.xlu0 %v514, 122
        %v520 = vpop.permute.xlu0 %519
        %v523 = vadd.f32 %v509, %v518
        %v524 = vadd.f32 %v510, %v520
        %s525 = sld [smem:[#allocation7 + $0x15]]
        %v526 = vld [vmem:[#allocation2 + $0x3] sm:$0xff]
        %v527 = vld [vmem:[#allocation2 + $0xb] sm:$0xff]
        %v528 = vstv %s525
        %v529 = vmul.f32 %v528, %v526
        %v530 = vmul.f32 %v528, %v527
        %v531 = vadd.f32 %v523, %v529
        %v532 = vadd.f32 %v524, %v530
        %s533 = sld [smem:[#allocation7 + $0x16]]
        %v534 = vstv %s533
        %v535 = vmul.f32 %v534, %v526
        %v536 = vmul.f32 %v534, %v527
        %539 = vrot.lane.b32.xlu0 %v535, 127
        %v540 = vpop.permute.xlu0 %539
        %541 = vrot.lane.b32.xlu0 %v536, 127
        %v542 = vpop.permute.xlu0 %541
        %v545 = vadd.f32 %v531, %v540
        %v546 = vadd.f32 %v532, %v542
        %s547 = sld [smem:[#allocation7 + $0x17]]
        %v548 = vstv %s547
        %v549 = vmul.f32 %v548, %v526
        %v550 = vmul.f32 %v548, %v527
        %553 = vrot.lane.b32.xlu0 %v549, 126
        %v554 = vpop.permute.xlu0 %553
        %555 = vrot.lane.b32.xlu0 %v550, 126
        %v556 = vpop.permute.xlu0 %555
        %v559 = vadd.f32 %v545, %v554
        %v560 = vadd.f32 %v546, %v556
        %s561 = sld [smem:[#allocation7 + $0x18]]
        %v562 = vstv %s561
        %v563 = vmul.f32 %v562, %v526
        %v564 = vmul.f32 %v562, %v527
        %567 = vrot.lane.b32.xlu0 %v563, 125
        %v568 = vpop.permute.xlu0 %567
        %569 = vrot.lane.b32.xlu0 %v564, 125
        %v570 = vpop.permute.xlu0 %569
        %v573 = vadd.f32 %v559, %v568
        %v574 = vadd.f32 %v560, %v570
        %s575 = sld [smem:[#allocation7 + $0x19]]
        %v576 = vstv %s575
        %v577 = vmul.f32 %v576, %v526
        %v578 = vmul.f32 %v576, %v527
        %581 = vrot.lane.b32.xlu0 %v577, 124
        %v582 = vpop.permute.xlu0 %581
        %583 = vrot.lane.b32.xlu0 %v578, 124
        %v584 = vpop.permute.xlu0 %583
        %v587 = vadd.f32 %v573, %v582
        %v588 = vadd.f32 %v574, %v584
        %s589 = sld [smem:[#allocation7 + $0x1a]]
        %v590 = vstv %s589
        %v591 = vmul.f32 %v590, %v526
        %v592 = vmul.f32 %v590, %v527
        %595 = vrot.lane.b32.xlu0 %v591, 123
        %v596 = vpop.permute.xlu0 %595
        %597 = vrot.lane.b32.xlu0 %v592, 123
        %v598 = vpop.permute.xlu0 %597
        %v601 = vadd.f32 %v587, %v596
        %v602 = vadd.f32 %v588, %v598
        %s603 = sld [smem:[#allocation7 + $0x1b]]
        %v604 = vstv %s603
        %v605 = vmul.f32 %v604, %v526
        %v606 = vmul.f32 %v604, %v527
        %609 = vrot.lane.b32.xlu0 %v605, 122
        %v610 = vpop.permute.xlu0 %609
        %611 = vrot.lane.b32.xlu0 %v606, 122
        %v612 = vpop.permute.xlu0 %611
        %v615 = vadd.f32 %v601, %v610
        %v616 = vadd.f32 %v602, %v612
        %s617 = sld [smem:[#allocation7 + $0x1c]]
        %v618 = vld [vmem:[#allocation2 + $0x4] sm:$0xff]
        %v619 = vld [vmem:[#allocation2 + $0xc] sm:$0xff]
        %v620 = vstv %s617
        %v621 = vmul.f32 %v620, %v618
        %v622 = vmul.f32 %v620, %v619
        %v623 = vadd.f32 %v615, %v621
        %v624 = vadd.f32 %v616, %v622
        %s625 = sld [smem:[#allocation7 + $0x1d]]
        %v626 = vstv %s625
        %v627 = vmul.f32 %v626, %v618
        %v628 = vmul.f32 %v626, %v619
        %631 = vrot.lane.b32.xlu0 %v627, 127
        %v632 = vpop.permute.xlu0 %631
        %633 = vrot.lane.b32.xlu0 %v628, 127
        %v634 = vpop.permute.xlu0 %633
        %v637 = vadd.f32 %v623, %v632
        %v638 = vadd.f32 %v624, %v634
        %s639 = sld [smem:[#allocation7 + $0x1e]]
        %v640 = vstv %s639
        %v641 = vmul.f32 %v640, %v618
        %v642 = vmul.f32 %v640, %v619
        %645 = vrot.lane.b32.xlu0 %v641, 126
        %v646 = vpop.permute.xlu0 %645
        %647 = vrot.lane.b32.xlu0 %v642, 126
        %v648 = vpop.permute.xlu0 %647
        %v651 = vadd.f32 %v637, %v646
        %v652 = vadd.f32 %v638, %v648
        %s653 = sld [smem:[#allocation7 + $0x1f]]
        %v654 = vstv %s653
        %v655 = vmul.f32 %v654, %v618
        %v656 = vmul.f32 %v654, %v619
        %659 = vrot.lane.b32.xlu0 %v655, 125
        %v660 = vpop.permute.xlu0 %659
        %661 = vrot.lane.b32.xlu0 %v656, 125
        %v662 = vpop.permute.xlu0 %661
        %v665 = vadd.f32 %v651, %v660
        %v666 = vadd.f32 %v652, %v662
        %s667 = sld [smem:[#allocation7 + $0x20]]
        %v668 = vstv %s667
        %v669 = vmul.f32 %v668, %v618
        %v670 = vmul.f32 %v668, %v619
        %673 = vrot.lane.b32.xlu0 %v669, 124
        %v674 = vpop.permute.xlu0 %673
        %675 = vrot.lane.b32.xlu0 %v670, 124
        %v676 = vpop.permute.xlu0 %675
        %v679 = vadd.f32 %v665, %v674
        %v680 = vadd.f32 %v666, %v676
        %s681 = sld [smem:[#allocation7 + $0x21]]
        %v682 = vstv %s681
        %v683 = vmul.f32 %v682, %v618
        %v684 = vmul.f32 %v682, %v619
        %687 = vrot.lane.b32.xlu0 %v683, 123
        %v688 = vpop.permute.xlu0 %687
        %689 = vrot.lane.b32.xlu0 %v684, 123
        %v690 = vpop.permute.xlu0 %689
        %v693 = vadd.f32 %v679, %v688
        %v694 = vadd.f32 %v680, %v690
        %s695 = sld [smem:[#allocation7 + $0x22]]
        %v696 = vstv %s695
        %v697 = vmul.f32 %v696, %v618
        %v698 = vmul.f32 %v696, %v619
        %701 = vrot.lane.b32.xlu0 %v697, 122
        %v702 = vpop.permute.xlu0 %701
        %703 = vrot.lane.b32.xlu0 %v698, 122
        %v704 = vpop.permute.xlu0 %703
        %v707 = vadd.f32 %v693, %v702
        %v708 = vadd.f32 %v694, %v704
        %s709 = sld [smem:[#allocation7 + $0x23]]
        %v710 = vld [vmem:[#allocation2 + $0x5] sm:$0xff]
        %v711 = vld [vmem:[#allocation2 + $0xd] sm:$0xff]
        %v712 = vstv %s709
        %v713 = vmul.f32 %v712, %v710
        %v714 = vmul.f32 %v712, %v711
        %v715 = vadd.f32 %v707, %v713
        %v716 = vadd.f32 %v708, %v714
        %s717 = sld [smem:[#allocation7 + $0x24]]
        %v718 = vstv %s717
        %v719 = vmul.f32 %v718, %v710
        %v720 = vmul.f32 %v718, %v711
        %723 = vrot.lane.b32.xlu0 %v719, 127
        %v724 = vpop.permute.xlu0 %723
        %725 = vrot.lane.b32.xlu0 %v720, 127
        %v726 = vpop.permute.xlu0 %725
        %v729 = vadd.f32 %v715, %v724
        %v730 = vadd.f32 %v716, %v726
        %s731 = sld [smem:[#allocation7 + $0x25]]
        %v732 = vstv %s731
        %v733 = vmul.f32 %v732, %v710
        %v734 = vmul.f32 %v732, %v711
        %737 = vrot.lane.b32.xlu0 %v733, 126
        %v738 = vpop.permute.xlu0 %737
        %739 = vrot.lane.b32.xlu0 %v734, 126
        %v740 = vpop.permute.xlu0 %739
        %v743 = vadd.f32 %v729, %v738
        %v744 = vadd.f32 %v730, %v740
        %s745 = sld [smem:[#allocation7 + $0x26]]
        %v746 = vstv %s745
        %v747 = vmul.f32 %v746, %v710
        %v748 = vmul.f32 %v746, %v711
        %751 = vrot.lane.b32.xlu0 %v747, 125
        %v752 = vpop.permute.xlu0 %751
        %753 = vrot.lane.b32.xlu0 %v748, 125
        %v754 = vpop.permute.xlu0 %753
        %v757 = vadd.f32 %v743, %v752
        %v758 = vadd.f32 %v744, %v754
        %s759 = sld [smem:[#allocation7 + $0x27]]
        %v760 = vstv %s759
        %v761 = vmul.f32 %v760, %v710
        %v762 = vmul.f32 %v760, %v711
        %765 = vrot.lane.b32.xlu0 %v761, 124
        %v766 = vpop.permute.xlu0 %765
        %767 = vrot.lane.b32.xlu0 %v762, 124
        %v768 = vpop.permute.xlu0 %767
        %v771 = vadd.f32 %v757, %v766
        %v772 = vadd.f32 %v758, %v768
        %s773 = sld [smem:[#allocation7 + $0x28]]
        %v774 = vstv %s773
        %v775 = vmul.f32 %v774, %v710
        %v776 = vmul.f32 %v774, %v711
        %779 = vrot.lane.b32.xlu0 %v775, 123
        %v780 = vpop.permute.xlu0 %779
        %781 = vrot.lane.b32.xlu0 %v776, 123
        %v782 = vpop.permute.xlu0 %781
        %v785 = vadd.f32 %v771, %v780
        %v786 = vadd.f32 %v772, %v782
        %s787 = sld [smem:[#allocation7 + $0x29]]
        %v788 = vstv %s787
        %v789 = vmul.f32 %v788, %v710
        %v790 = vmul.f32 %v788, %v711
        %793 = vrot.lane.b32.xlu0 %v789, 122
        %v794 = vpop.permute.xlu0 %793
        %795 = vrot.lane.b32.xlu0 %v790, 122
        %v796 = vpop.permute.xlu0 %795
        %v799 = vadd.f32 %v785, %v794
        %v800 = vadd.f32 %v786, %v796
        %s801 = sld [smem:[#allocation7 + $0x2a]]
        %v802 = vld [vmem:[#allocation2 + $0x6] sm:$0xff]
        %v803 = vld [vmem:[#allocation2 + $0xe] sm:$0xff]
        %v804 = vstv %s801
        %v805 = vmul.f32 %v804, %v802
        %v806 = vmul.f32 %v804, %v803
        %v807 = vadd.f32 %v799, %v805
        %v808 = vadd.f32 %v800, %v806
        %s809 = sld [smem:[#allocation7 + $0x2b]]
        %v810 = vstv %s809
        %v811 = vmul.f32 %v810, %v802
        %v812 = vmul.f32 %v810, %v803
        %815 = vrot.lane.b32.xlu0 %v811, 127
        %v816 = vpop.permute.xlu0 %815
        %817 = vrot.lane.b32.xlu0 %v812, 127
        %v818 = vpop.permute.xlu0 %817
        %v821 = vadd.f32 %v807, %v816
        %v822 = vadd.f32 %v808, %v818
        %s823 = sld [smem:[#allocation7 + $0x2c]]
        %v824 = vstv %s823
        %v825 = vmul.f32 %v824, %v802
        %v826 = vmul.f32 %v824, %v803
        %829 = vrot.lane.b32.xlu0 %v825, 126
        %v830 = vpop.permute.xlu0 %829
        %831 = vrot.lane.b32.xlu0 %v826, 126
        %v832 = vpop.permute.xlu0 %831
        %v835 = vadd.f32 %v821, %v830
        %v836 = vadd.f32 %v822, %v832
        %s837 = sld [smem:[#allocation7 + $0x2d]]
        %v838 = vstv %s837
        %v839 = vmul.f32 %v838, %v802
        %v840 = vmul.f32 %v838, %v803
        %843 = vrot.lane.b32.xlu0 %v839, 125
        %v844 = vpop.permute.xlu0 %843
        %845 = vrot.lane.b32.xlu0 %v840, 125
        %v846 = vpop.permute.xlu0 %845
        %v849 = vadd.f32 %v835, %v844
        %v850 = vadd.f32 %v836, %v846
        %s851 = sld [smem:[#allocation7 + $0x2e]]
        %v852 = vstv %s851
        %v853 = vmul.f32 %v852, %v802
        %v854 = vmul.f32 %v852, %v803
        %857 = vrot.lane.b32.xlu0 %v853, 124
        %v858 = vpop.permute.xlu0 %857
        %859 = vrot.lane.b32.xlu0 %v854, 124
        %v860 = vpop.permute.xlu0 %859
        %v863 = vadd.f32 %v849, %v858
        %v864 = vadd.f32 %v850, %v860
        %s865 = sld [smem:[#allocation7 + $0x2f]]
        %v866 = vstv %s865
        %v867 = vmul.f32 %v866, %v802
        %v868 = vmul.f32 %v866, %v803
        %871 = vrot.lane.b32.xlu0 %v867, 123
        %v872 = vpop.permute.xlu0 %871
        %873 = vrot.lane.b32.xlu0 %v868, 123
        %v874 = vpop.permute.xlu0 %873
        %v877 = vadd.f32 %v863, %v872
        %v878 = vadd.f32 %v864, %v874
        %s879 = sld [smem:[#allocation7 + $0x30]]
        %v880 = vstv %s879
        %v881 = vmul.f32 %v880, %v802
        %v882 = vmul.f32 %v880, %v803
        %885 = vrot.lane.b32.xlu0 %v881, 122
        %v886 = vpop.permute.xlu0 %885
        %887 = vrot.lane.b32.xlu0 %v882, 122
        %v888 = vpop.permute.xlu0 %887
        %v891 = vadd.f32 %v877, %v886
        %v892 = vadd.f32 %v878, %v888
        %s893 = sld [smem:[#allocation7 + $0x31]]
        %v894 = vld [vmem:[%s246] sm:$0xff]
        %v895 = vld [vmem:[%s246 + $0x8] sm:$0xff]
        %v896 = vstv %s893
        %v897 = vmul.f32 %v896, %v894
        %v898 = vmul.f32 %v896, %v895
        %v899 = vadd.f32 %v891, %v897
        %v900 = vadd.f32 %v892, %v898
        %s901 = sld [smem:[#allocation7 + $0x32]]
        %v902 = vstv %s901
        %v903 = vmul.f32 %v902, %v894
        %v904 = vmul.f32 %v902, %v895
        %907 = vrot.lane.b32.xlu0 %v903, 127
        %v908 = vpop.permute.xlu0 %907
        %909 = vrot.lane.b32.xlu0 %v904, 127
        %v910 = vpop.permute.xlu0 %909
        %v913 = vadd.f32 %v899, %v908
        %v914 = vadd.f32 %v900, %v910
        %s915 = sld [smem:[#allocation7 + $0x33]]
        %v916 = vstv %s915
        %v917 = vmul.f32 %v916, %v894
        %v918 = vmul.f32 %v916, %v895
        %921 = vrot.lane.b32.xlu0 %v917, 126
        %v922 = vpop.permute.xlu0 %921
        %923 = vrot.lane.b32.xlu0 %v918, 126
        %v924 = vpop.permute.xlu0 %923
        %v927 = vadd.f32 %v913, %v922
        %v928 = vadd.f32 %v914, %v924
        %s929 = sld [smem:[#allocation7 + $0x34]]
        %v930 = vstv %s929
        %v931 = vmul.f32 %v930, %v894
        %v932 = vmul.f32 %v930, %v895
        %935 = vrot.lane.b32.xlu0 %v931, 125
        %v936 = vpop.permute.xlu0 %935
        %937 = vrot.lane.b32.xlu0 %v932, 125
        %v938 = vpop.permute.xlu0 %937
        %v941 = vadd.f32 %v927, %v936
        %v942 = vadd.f32 %v928, %v938
        %s943 = sld [smem:[#allocation7 + $0x35]]
        %v944 = vstv %s943
        %v945 = vmul.f32 %v944, %v894
        %v946 = vmul.f32 %v944, %v895
        %949 = vrot.lane.b32.xlu0 %v945, 124
        %v950 = vpop.permute.xlu0 %949
        %951 = vrot.lane.b32.xlu0 %v946, 124
        %v952 = vpop.permute.xlu0 %951
        %v955 = vadd.f32 %v941, %v950
        %v956 = vadd.f32 %v942, %v952
        %s957 = sld [smem:[#allocation7 + $0x36]]
        %v958 = vstv %s957
        %v959 = vmul.f32 %v958, %v894
        %v960 = vmul.f32 %v958, %v895
        %963 = vrot.lane.b32.xlu0 %v959, 123
        %v964 = vpop.permute.xlu0 %963
        %965 = vrot.lane.b32.xlu0 %v960, 123
        %v966 = vpop.permute.xlu0 %965
        %v969 = vadd.f32 %v955, %v964
        %v970 = vadd.f32 %v956, %v966
        %s971 = sld [smem:[#allocation7 + $0x37]]
        %v972 = vstv %s971
        %v973 = vmul.f32 %v972, %v894
        %v974 = vmul.f32 %v972, %v895
        %977 = vrot.lane.b32.xlu0 %v973, 122
        %v978 = vpop.permute.xlu0 %977
        %979 = vrot.lane.b32.xlu0 %v974, 122
        %v980 = vpop.permute.xlu0 %979
        %v983 = vadd.f32 %v969, %v978
        %v984 = vadd.f32 %v970, %v980
        %s985 = sld [smem:[#allocation7 + $0x38]]
        %v986 = vld [vmem:[%s246 + $0x1] sm:$0xff]
        %v987 = vld [vmem:[%s246 + $0x9] sm:$0xff]
        %v988 = vstv %s985
        %v989 = vmul.f32 %v988, %v986
        %v990 = vmul.f32 %v988, %v987
        %v991 = vadd.f32 %v983, %v989
        %v992 = vadd.f32 %v984, %v990
        %s993 = sld [smem:[#allocation7 + $0x39]]
        %v994 = vstv %s993
        %v995 = vmul.f32 %v994, %v986
        %v996 = vmul.f32 %v994, %v987
        %999 = vrot.lane.b32.xlu0 %v995, 127
        %v1000 = vpop.permute.xlu0 %999
        %1001 = vrot.lane.b32.xlu0 %v996, 127
        %v1002 = vpop.permute.xlu0 %1001
        %v1005 = vadd.f32 %v991, %v1000
        %v1006 = vadd.f32 %v992, %v1002
        %s1007 = sld [smem:[#allocation7 + $0x3a]]
        %v1008 = vstv %s1007
        %v1009 = vmul.f32 %v1008, %v986
        %v1010 = vmul.f32 %v1008, %v987
        %1013 = vrot.lane.b32.xlu0 %v1009, 126
        %v1014 = vpop.permute.xlu0 %1013
        %1015 = vrot.lane.b32.xlu0 %v1010, 126
        %v1016 = vpop.permute.xlu0 %1015
        %v1019 = vadd.f32 %v1005, %v1014
        %v1020 = vadd.f32 %v1006, %v1016
        %s1021 = sld [smem:[#allocation7 + $0x3b]]
        %v1022 = vstv %s1021
        %v1023 = vmul.f32 %v1022, %v986
        %v1024 = vmul.f32 %v1022, %v987
        %1027 = vrot.lane.b32.xlu0 %v1023, 125
        %v1028 = vpop.permute.xlu0 %1027
        %1029 = vrot.lane.b32.xlu0 %v1024, 125
        %v1030 = vpop.permute.xlu0 %1029
        %v1033 = vadd.f32 %v1019, %v1028
        %v1034 = vadd.f32 %v1020, %v1030
        %s1035 = sld [smem:[#allocation7 + $0x3c]]
        %v1036 = vstv %s1035
        %v1037 = vmul.f32 %v1036, %v986
        %v1038 = vmul.f32 %v1036, %v987
        %1041 = vrot.lane.b32.xlu0 %v1037, 124
        %v1042 = vpop.permute.xlu0 %1041
        %1043 = vrot.lane.b32.xlu0 %v1038, 124
        %v1044 = vpop.permute.xlu0 %1043
        %v1047 = vadd.f32 %v1033, %v1042
        %v1048 = vadd.f32 %v1034, %v1044
        %s1049 = sld [smem:[#allocation7 + $0x3d]]
        %v1050 = vstv %s1049
        %v1051 = vmul.f32 %v1050, %v986
        %v1052 = vmul.f32 %v1050, %v987
        %1055 = vrot.lane.b32.xlu0 %v1051, 123
        %v1056 = vpop.permute.xlu0 %1055
        %1057 = vrot.lane.b32.xlu0 %v1052, 123
        %v1058 = vpop.permute.xlu0 %1057
        %v1061 = vadd.f32 %v1047, %v1056
        %v1062 = vadd.f32 %v1048, %v1058
        %s1063 = sld [smem:[#allocation7 + $0x3e]]
        %v1064 = vstv %s1063
        %v1065 = vmul.f32 %v1064, %v986
        %v1066 = vmul.f32 %v1064, %v987
        %1069 = vrot.lane.b32.xlu0 %v1065, 122
        %v1070 = vpop.permute.xlu0 %1069
        %1071 = vrot.lane.b32.xlu0 %v1066, 122
        %v1072 = vpop.permute.xlu0 %1071
        %v1075 = vadd.f32 %v1061, %v1070
        %v1076 = vadd.f32 %v1062, %v1072
        %s1077 = sld [smem:[#allocation7 + $0x3f]]
        %v1078 = vld [vmem:[%s246 + $0x2] sm:$0xff]
        %v1079 = vld [vmem:[%s246 + $0xa] sm:$0xff]
        %v1080 = vstv %s1077
        %v1081 = vmul.f32 %v1080, %v1078
        %v1082 = vmul.f32 %v1080, %v1079
        %v1083 = vadd.f32 %v1075, %v1081
        %v1084 = vadd.f32 %v1076, %v1082
        %s1085 = sld [smem:[#allocation7 + $0x40]]
        %v1086 = vstv %s1085
        %v1087 = vmul.f32 %v1086, %v1078
        %v1088 = vmul.f32 %v1086, %v1079
        %1091 = vrot.lane.b32.xlu0 %v1087, 127
        %v1092 = vpop.permute.xlu0 %1091
        %1093 = vrot.lane.b32.xlu0 %v1088, 127
        %v1094 = vpop.permute.xlu0 %1093
        %v1097 = vadd.f32 %v1083, %v1092
        %v1098 = vadd.f32 %v1084, %v1094
        %s1099 = sld [smem:[#allocation7 + $0x41]]
        %v1100 = vstv %s1099
        %v1101 = vmul.f32 %v1100, %v1078
        %v1102 = vmul.f32 %v1100, %v1079
        %1105 = vrot.lane.b32.xlu0 %v1101, 126
        %v1106 = vpop.permute.xlu0 %1105
        %1107 = vrot.lane.b32.xlu0 %v1102, 126
        %v1108 = vpop.permute.xlu0 %1107
        %v1111 = vadd.f32 %v1097, %v1106
        %v1112 = vadd.f32 %v1098, %v1108
        %s1113 = sld [smem:[#allocation7 + $0x42]]
        %v1114 = vstv %s1113
        %v1115 = vmul.f32 %v1114, %v1078
        %v1116 = vmul.f32 %v1114, %v1079
        %1119 = vrot.lane.b32.xlu0 %v1115, 125
        %v1120 = vpop.permute.xlu0 %1119
        %1121 = vrot.lane.b32.xlu0 %v1116, 125
        %v1122 = vpop.permute.xlu0 %1121
        %v1125 = vadd.f32 %v1111, %v1120
        %v1126 = vadd.f32 %v1112, %v1122
        %s1127 = sld [smem:[#allocation7 + $0x43]]
        %v1128 = vstv %s1127
        %v1129 = vmul.f32 %v1128, %v1078
        %v1130 = vmul.f32 %v1128, %v1079
        %1133 = vrot.lane.b32.xlu0 %v1129, 124
        %v1134 = vpop.permute.xlu0 %1133
        %1135 = vrot.lane.b32.xlu0 %v1130, 124
        %v1136 = vpop.permute.xlu0 %1135
        %v1139 = vadd.f32 %v1125, %v1134
        %v1140 = vadd.f32 %v1126, %v1136
        %s1141 = sld [smem:[#allocation7 + $0x44]]
        %v1142 = vstv %s1141
        %v1143 = vmul.f32 %v1142, %v1078
        %v1144 = vmul.f32 %v1142, %v1079
        %1147 = vrot.lane.b32.xlu0 %v1143, 123
        %v1148 = vpop.permute.xlu0 %1147
        %1149 = vrot.lane.b32.xlu0 %v1144, 123
        %v1150 = vpop.permute.xlu0 %1149
        %v1153 = vadd.f32 %v1139, %v1148
        %v1154 = vadd.f32 %v1140, %v1150
        %s1155 = sld [smem:[#allocation7 + $0x45]]
        %v1156 = vstv %s1155
        %v1157 = vmul.f32 %v1156, %v1078
        %v1158 = vmul.f32 %v1156, %v1079
        %1161 = vrot.lane.b32.xlu0 %v1157, 122
        %v1162 = vpop.permute.xlu0 %1161
        %1163 = vrot.lane.b32.xlu0 %v1158, 122
        %v1164 = vpop.permute.xlu0 %1163
        %v1167 = vadd.f32 %v1153, %v1162
        %v1168 = vadd.f32 %v1154, %v1164
        %s1169 = sld [smem:[#allocation7 + $0x46]]
        %v1170 = vld [vmem:[%s246 + $0x3] sm:$0xff]
        %v1171 = vld [vmem:[%s246 + $0xb] sm:$0xff]
        %v1172 = vstv %s1169
        %v1173 = vmul.f32 %v1172, %v1170
        %v1174 = vmul.f32 %v1172, %v1171
        %v1175 = vadd.f32 %v1167, %v1173
        %v1176 = vadd.f32 %v1168, %v1174
        %s1177 = sld [smem:[#allocation7 + $0x47]]
        %v1178 = vstv %s1177
        %v1179 = vmul.f32 %v1178, %v1170
        %v1180 = vmul.f32 %v1178, %v1171
        %1183 = vrot.lane.b32.xlu0 %v1179, 127
        %v1184 = vpop.permute.xlu0 %1183
        %1185 = vrot.lane.b32.xlu0 %v1180, 127
        %v1186 = vpop.permute.xlu0 %1185
        %v1189 = vadd.f32 %v1175, %v1184
        %v1190 = vadd.f32 %v1176, %v1186
        %s1191 = sld [smem:[#allocation7 + $0x48]]
        %v1192 = vstv %s1191
        %v1193 = vmul.f32 %v1192, %v1170
        %v1194 = vmul.f32 %v1192, %v1171
        %1197 = vrot.lane.b32.xlu0 %v1193, 126
        %v1198 = vpop.permute.xlu0 %1197
        %1199 = vrot.lane.b32.xlu0 %v1194, 126
        %v1200 = vpop.permute.xlu0 %1199
        %v1203 = vadd.f32 %v1189, %v1198
        %v1204 = vadd.f32 %v1190, %v1200
        %s1205 = sld [smem:[#allocation7 + $0x49]]
        %v1206 = vstv %s1205
        %v1207 = vmul.f32 %v1206, %v1170
        %v1208 = vmul.f32 %v1206, %v1171
        %1211 = vrot.lane.b32.xlu0 %v1207, 125
        %v1212 = vpop.permute.xlu0 %1211
        %1213 = vrot.lane.b32.xlu0 %v1208, 125
        %v1214 = vpop.permute.xlu0 %1213
        %v1217 = vadd.f32 %v1203, %v1212
        %v1218 = vadd.f32 %v1204, %v1214
        %s1219 = sld [smem:[#allocation7 + $0x4a]]
        %v1220 = vstv %s1219
        %v1221 = vmul.f32 %v1220, %v1170
        %v1222 = vmul.f32 %v1220, %v1171
        %1225 = vrot.lane.b32.xlu0 %v1221, 124
        %v1226 = vpop.permute.xlu0 %1225
        %1227 = vrot.lane.b32.xlu0 %v1222, 124
        %v1228 = vpop.permute.xlu0 %1227
        %v1231 = vadd.f32 %v1217, %v1226
        %v1232 = vadd.f32 %v1218, %v1228
        %s1233 = sld [smem:[#allocation7 + $0x4b]]
        %v1234 = vstv %s1233
        %v1235 = vmul.f32 %v1234, %v1170
        %v1236 = vmul.f32 %v1234, %v1171
        %1239 = vrot.lane.b32.xlu0 %v1235, 123
        %v1240 = vpop.permute.xlu0 %1239
        %1241 = vrot.lane.b32.xlu0 %v1236, 123
        %v1242 = vpop.permute.xlu0 %1241
        %v1245 = vadd.f32 %v1231, %v1240
        %v1246 = vadd.f32 %v1232, %v1242
        %s1247 = sld [smem:[#allocation7 + $0x4c]]
        %v1248 = vstv %s1247
        %v1249 = vmul.f32 %v1248, %v1170
        %v1250 = vmul.f32 %v1248, %v1171
        %1253 = vrot.lane.b32.xlu0 %v1249, 122
        %v1254 = vpop.permute.xlu0 %1253
        %1255 = vrot.lane.b32.xlu0 %v1250, 122
        %v1256 = vpop.permute.xlu0 %1255
        %v1259 = vadd.f32 %v1245, %v1254
        %v1260 = vadd.f32 %v1246, %v1256
        %s1261 = sld [smem:[#allocation7 + $0x4d]]
        %v1262 = vld [vmem:[%s246 + $0x4] sm:$0xff]
        %v1263 = vld [vmem:[%s246 + $0xc] sm:$0xff]
        %v1264 = vstv %s1261
        %v1265 = vmul.f32 %v1264, %v1262
        %v1266 = vmul.f32 %v1264, %v1263
        %v1267 = vadd.f32 %v1259, %v1265
        %v1268 = vadd.f32 %v1260, %v1266
        %s1269 = sld [smem:[#allocation7 + $0x4e]]
        %v1270 = vstv %s1269
        %v1271 = vmul.f32 %v1270, %v1262
        %v1272 = vmul.f32 %v1270, %v1263
        %1275 = vrot.lane.b32.xlu0 %v1271, 127
        %v1276 = vpop.permute.xlu0 %1275
        %1277 = vrot.lane.b32.xlu0 %v1272, 127
        %v1278 = vpop.permute.xlu0 %1277
        %v1281 = vadd.f32 %v1267, %v1276
        %v1282 = vadd.f32 %v1268, %v1278
        %s1283 = sld [smem:[#allocation7 + $0x4f]]
        %v1284 = vstv %s1283
        %v1285 = vmul.f32 %v1284, %v1262
        %v1286 = vmul.f32 %v1284, %v1263
        %1289 = vrot.lane.b32.xlu0 %v1285, 126
        %v1290 = vpop.permute.xlu0 %1289
        %1291 = vrot.lane.b32.xlu0 %v1286, 126
        %v1292 = vpop.permute.xlu0 %1291
        %v1295 = vadd.f32 %v1281, %v1290
        %v1296 = vadd.f32 %v1282, %v1292
        %s1297 = sld [smem:[#allocation7 + $0x50]]
        %v1298 = vstv %s1297
        %v1299 = vmul.f32 %v1298, %v1262
        %v1300 = vmul.f32 %v1298, %v1263
        %1303 = vrot.lane.b32.xlu0 %v1299, 125
        %v1304 = vpop.permute.xlu0 %1303
        %1305 = vrot.lane.b32.xlu0 %v1300, 125
        %v1306 = vpop.permute.xlu0 %1305
        %v1309 = vadd.f32 %v1295, %v1304
        %v1310 = vadd.f32 %v1296, %v1306
        %s1311 = sld [smem:[#allocation7 + $0x51]]
        %v1312 = vstv %s1311
        %v1313 = vmul.f32 %v1312, %v1262
        %v1314 = vmul.f32 %v1312, %v1263
        %1317 = vrot.lane.b32.xlu0 %v1313, 124
        %v1318 = vpop.permute.xlu0 %1317
        %1319 = vrot.lane.b32.xlu0 %v1314, 124
        %v1320 = vpop.permute.xlu0 %1319
        %v1323 = vadd.f32 %v1309, %v1318
        %v1324 = vadd.f32 %v1310, %v1320
        %s1325 = sld [smem:[#allocation7 + $0x52]]
        %v1326 = vstv %s1325
        %v1327 = vmul.f32 %v1326, %v1262
        %v1328 = vmul.f32 %v1326, %v1263
        %1331 = vrot.lane.b32.xlu0 %v1327, 123
        %v1332 = vpop.permute.xlu0 %1331
        %1333 = vrot.lane.b32.xlu0 %v1328, 123
        %v1334 = vpop.permute.xlu0 %1333
        %v1337 = vadd.f32 %v1323, %v1332
        %v1338 = vadd.f32 %v1324, %v1334
        %s1339 = sld [smem:[#allocation7 + $0x53]]
        %v1340 = vstv %s1339
        %v1341 = vmul.f32 %v1340, %v1262
        %v1342 = vmul.f32 %v1340, %v1263
        %1345 = vrot.lane.b32.xlu0 %v1341, 122
        %v1346 = vpop.permute.xlu0 %1345
        %1347 = vrot.lane.b32.xlu0 %v1342, 122
        %v1348 = vpop.permute.xlu0 %1347
        %v1351 = vadd.f32 %v1337, %v1346
        %v1352 = vadd.f32 %v1338, %v1348
        %s1353 = sld [smem:[#allocation7 + $0x54]]
        %v1354 = vld [vmem:[%s246 + $0x5] sm:$0xff]
        %v1355 = vld [vmem:[%s246 + $0xd] sm:$0xff]
        %v1356 = vstv %s1353
        %v1357 = vmul.f32 %v1356, %v1354
        %v1358 = vmul.f32 %v1356, %v1355
        %v1359 = vadd.f32 %v1351, %v1357
        %v1360 = vadd.f32 %v1352, %v1358
        %s1361 = sld [smem:[#allocation7 + $0x55]]
        %v1362 = vstv %s1361
        %v1363 = vmul.f32 %v1362, %v1354
        %v1364 = vmul.f32 %v1362, %v1355
        %1367 = vrot.lane.b32.xlu0 %v1363, 127
        %v1368 = vpop.permute.xlu0 %1367
        %1369 = vrot.lane.b32.xlu0 %v1364, 127
        %v1370 = vpop.permute.xlu0 %1369
        %v1373 = vadd.f32 %v1359, %v1368
        %v1374 = vadd.f32 %v1360, %v1370
        %s1375 = sld [smem:[#allocation7 + $0x56]]
        %v1376 = vstv %s1375
        %v1377 = vmul.f32 %v1376, %v1354
        %v1378 = vmul.f32 %v1376, %v1355
        %1381 = vrot.lane.b32.xlu0 %v1377, 126
        %v1382 = vpop.permute.xlu0 %1381
        %1383 = vrot.lane.b32.xlu0 %v1378, 126
        %v1384 = vpop.permute.xlu0 %1383
        %v1387 = vadd.f32 %v1373, %v1382
        %v1388 = vadd.f32 %v1374, %v1384
        %s1389 = sld [smem:[#allocation7 + $0x57]]
        %v1390 = vstv %s1389
        %v1391 = vmul.f32 %v1390, %v1354
        %v1392 = vmul.f32 %v1390, %v1355
        %1395 = vrot.lane.b32.xlu0 %v1391, 125
        %v1396 = vpop.permute.xlu0 %1395
        %1397 = vrot.lane.b32.xlu0 %v1392, 125
        %v1398 = vpop.permute.xlu0 %1397
        %v1401 = vadd.f32 %v1387, %v1396
        %v1402 = vadd.f32 %v1388, %v1398
        %s1403 = sld [smem:[#allocation7 + $0x58]]
        %v1404 = vstv %s1403
        %v1405 = vmul.f32 %v1404, %v1354
        %v1406 = vmul.f32 %v1404, %v1355
        %1409 = vrot.lane.b32.xlu0 %v1405, 124
        %v1410 = vpop.permute.xlu0 %1409
        %1411 = vrot.lane.b32.xlu0 %v1406, 124
        %v1412 = vpop.permute.xlu0 %1411
        %v1415 = vadd.f32 %v1401, %v1410
        %v1416 = vadd.f32 %v1402, %v1412
        %s1417 = sld [smem:[#allocation7 + $0x59]]
        %v1418 = vstv %s1417
        %v1419 = vmul.f32 %v1418, %v1354
        %v1420 = vmul.f32 %v1418, %v1355
        %1423 = vrot.lane.b32.xlu0 %v1419, 123
        %v1424 = vpop.permute.xlu0 %1423
        %1425 = vrot.lane.b32.xlu0 %v1420, 123
        %v1426 = vpop.permute.xlu0 %1425
        %v1429 = vadd.f32 %v1415, %v1424
        %v1430 = vadd.f32 %v1416, %v1426
        %s1431 = sld [smem:[#allocation7 + $0x5a]]
        %v1432 = vstv %s1431
        %v1433 = vmul.f32 %v1432, %v1354
        %v1434 = vmul.f32 %v1432, %v1355
        %1437 = vrot.lane.b32.xlu0 %v1433, 122
        %v1438 = vpop.permute.xlu0 %1437
        %1439 = vrot.lane.b32.xlu0 %v1434, 122
        %v1440 = vpop.permute.xlu0 %1439
        %v1443 = vadd.f32 %v1429, %v1438
        %v1444 = vadd.f32 %v1430, %v1440
        %s1445 = sld [smem:[#allocation7 + $0x5b]]
        %v1446 = vld [vmem:[%s246 + $0x6] sm:$0xff]
        %v1447 = vld [vmem:[%s246 + $0xe] sm:$0xff]
        %v1448 = vstv %s1445
        %v1449 = vmul.f32 %v1448, %v1446
        %v1450 = vmul.f32 %v1448, %v1447
        %v1451 = vadd.f32 %v1443, %v1449
        %v1452 = vadd.f32 %v1444, %v1450
        %s1453 = sld [smem:[#allocation7 + $0x5c]]
        %v1454 = vstv %s1453
        %v1455 = vmul.f32 %v1454, %v1446
        %v1456 = vmul.f32 %v1454, %v1447
        %1459 = vrot.lane.b32.xlu0 %v1455, 127
        %v1460 = vpop.permute.xlu0 %1459
        %1461 = vrot.lane.b32.xlu0 %v1456, 127
        %v1462 = vpop.permute.xlu0 %1461
        %v1465 = vadd.f32 %v1451, %v1460
        %v1466 = vadd.f32 %v1452, %v1462
        %s1467 = sld [smem:[#allocation7 + $0x5d]]
        %v1468 = vstv %s1467
        %v1469 = vmul.f32 %v1468, %v1446
        %v1470 = vmul.f32 %v1468, %v1447
        %1473 = vrot.lane.b32.xlu0 %v1469, 126
        %v1474 = vpop.permute.xlu0 %1473
        %1475 = vrot.lane.b32.xlu0 %v1470, 126
        %v1476 = vpop.permute.xlu0 %1475
        %v1479 = vadd.f32 %v1465, %v1474
        %v1480 = vadd.f32 %v1466, %v1476
        %s1481 = sld [smem:[#allocation7 + $0x5e]]
        %v1482 = vstv %s1481
        %v1483 = vmul.f32 %v1482, %v1446
        %v1484 = vmul.f32 %v1482, %v1447
        %1487 = vrot.lane.b32.xlu0 %v1483, 125
        %v1488 = vpop.permute.xlu0 %1487
        %1489 = vrot.lane.b32.xlu0 %v1484, 125
        %v1490 = vpop.permute.xlu0 %1489
        %v1493 = vadd.f32 %v1479, %v1488
        %v1494 = vadd.f32 %v1480, %v1490
        %s1495 = sld [smem:[#allocation7 + $0x5f]]
        %v1496 = vstv %s1495
        %v1497 = vmul.f32 %v1496, %v1446
        %v1498 = vmul.f32 %v1496, %v1447
        %1501 = vrot.lane.b32.xlu0 %v1497, 124
        %v1502 = vpop.permute.xlu0 %1501
        %1503 = vrot.lane.b32.xlu0 %v1498, 124
        %v1504 = vpop.permute.xlu0 %1503
        %v1507 = vadd.f32 %v1493, %v1502
        %v1508 = vadd.f32 %v1494, %v1504
        %s1509 = sld [smem:[#allocation7 + $0x60]]
        %v1510 = vstv %s1509
        %v1511 = vmul.f32 %v1510, %v1446
        %v1512 = vmul.f32 %v1510, %v1447
        %1515 = vrot.lane.b32.xlu0 %v1511, 123
        %v1516 = vpop.permute.xlu0 %1515
        %1517 = vrot.lane.b32.xlu0 %v1512, 123
        %v1518 = vpop.permute.xlu0 %1517
        %v1521 = vadd.f32 %v1507, %v1516
        %v1522 = vadd.f32 %v1508, %v1518
        %s1523 = sld [smem:[#allocation7 + $0x61]]
        %v1524 = vstv %s1523
        %v1525 = vmul.f32 %v1524, %v1446
        %v1526 = vmul.f32 %v1524, %v1447
        %1529 = vrot.lane.b32.xlu0 %v1525, 122
        %v1530 = vpop.permute.xlu0 %1529
        %1531 = vrot.lane.b32.xlu0 %v1526, 122
        %v1532 = vpop.permute.xlu0 %1531
        %v1535 = vadd.f32 %v1521, %v1530
        %v1536 = vadd.f32 %v1522, %v1532
        %v1537 = vxor.u32 %v1535, 2147483648
        %v1538 = vxor.u32 %v1536, 2147483648
        %v1539 = vmul.f32 %v1537, 1.442695
        %v1540 = vpow.pop %v1539
        %v1541 = vmul.f32 %v1538, 1.442695
        %v1542 = vpow.pop %v1541
        %v1543 = vadd.f32 %v1540, 1.0
        %v1544 = vadd.f32 %v1542, 1.0
        %v1545 = vrcp.pop %v1543
        %v1546 = vmul.f32 1.0, %v1545
        %v1547 = vrcp.pop %v1544
        %v1548 = vmul.f32 1.0, %v1547
        %1549 = vst.msk [vmem:[%s175] sm:$0xff] %vm184, %v1546
        %1550 = vst.msk [vmem:[%s175 + $0x8] sm:$0xff] %vm184, %v1548
        %s1551 = sand.u32 %s75, 1
        %s1552 = scalar_lea.sflag [#allocation5], %s1551
        %s1553 = sand.u32 %s75, 1
        %s1554 = smul.addr %s1553, 16
        %s1555 = scalar_lea.vmem [#allocation8], %s1554
        // Predicated region
        $region41: #{tpu_custom_call.1} parent=27 // pred_check
          %p1556 = pneg %p85
        $region42: #{tpu_custom_call.1} parent=27 // pred_check_branch
          %1558 = sbr.rel (%p1556) target = $region44
        $region43: #{tpu_custom_call.1} parent=27 // pred_region
          %s1560 = ssub.s32 256, 256
          %1561 = vsyncadd %s1552, %s1560
          %s1562 = smul.addr %s20, 2
          %s1563 = smul.addr %s1562, 128
          %s1564 = scalar_lea.hbm %s2, %s1563
          %s1565 = sshll.u32 %s1555, 4
          %s1566 = int_to_ptr.vmem [resolvable:$true] %s1565
          %1571 = dma.vmem_to_hbm [thread:$0]  %s1566, 256, %s1564, %s1552, 128, 128, 8
        $region44: #{tpu_custom_call.1} parent=27 // pred_fallthru
          _
      $region28: #{tpu_custom_call.1} parent=5 // pred_fallthru
        _
      %p1572 = scmp.le.s32.totalorder 2, %s15
      // Predicated region
      $region45: #{tpu_custom_call.1} parent=5 // pred_check
        %p1573 = pneg %p1572
      $region46: #{tpu_custom_call.1} parent=5 // pred_check_branch
        %1575 = sbr.rel (%p1573) target = $region48
      $region47: #{tpu_custom_call.1} parent=5 // pred_region
        %s1576 = ssub.s32 %s15, 2
        // Predicated region
        $region49: #{tpu_custom_call.1} parent=47 // pred_check
          %p1577 = pneg %p91
        $region50: #{tpu_custom_call.1} parent=47 // pred_check_branch
          %1579 = sbr.rel (%p1577) target = $region52
        $region51: #{tpu_custom_call.1} parent=47 // pred_region
          %s1580 = sand.u32 %s76, 1
          %s1581 = scalar_lea.sflag [#allocation5], %s1580
          %s1582 = sand.u32 %s76, 1
          %s1583 = smul.addr %s1582, 16
          %s1584 = scalar_lea.vmem [#allocation8], %s1583
          %1585 = dma.done %s1581, 256
        $region52: #{tpu_custom_call.1} parent=47 // pred_fallthru
          _
      $region48: #{tpu_custom_call.1} parent=5 // pred_fallthru
        _
    $region6: #{tpu_custom_call.1} parent=1 // loop_footer
      %s19 = sadd.s32 1, %s15
    $region7: #{tpu_custom_call.1} parent=1 // loop_footer_branch
      %14 = sbr.rel target = $region3
    $region8: #{tpu_custom_call.1} parent=1 // loop_exit
      _
    %1586 = vsyncpa [#allocation4], 1
    %s1587 = scalar_lea.sflag [#allocation4], 1
    %1588 = vsyncpa %s1587, 1
    %1589 = vsyncpa [#allocation5], 1
    %s1590 = scalar_lea.sflag [#allocation5], 1
    %1591 = vsyncpa %s1590, 1
    %1592 = vsyncpa [#allocation6], 1
    %s1593 = scalar_lea.sflag [#allocation6], 1
    %1594 = vsyncpa %s1593, 1

</llo_original>
